<compile_context>
chip_gen: v5e
topology: v5e:2x2
jax: 0.10.0
libtpu: 0.0.40
codegen_flags: <defaults>
</compile_context>

<pallas_src>
import functools

import jax
import jax.numpy as jnp
from jax.experimental import pallas as pl
from jax.experimental.pallas import tpu as pltpu


# ---------------------------------------------------------------------------
# Hardware-derived knobs.
# ---------------------------------------------------------------------------
@functools.lru_cache(maxsize=None)
def _vmem_capacity_bytes() -> int:
    """Physical VMEM per core; conservative v7x default if the query fails."""
    try:
        return int(pltpu.get_tpu_info().vmem_capacity_bytes)
    except Exception:  # noqa: BLE001 - any failure -> safe v7x-sized default
        return 64 * 1024 * 1024


def _vmem_limit_bytes() -> int:
    # ~70% of physical VMEM: headroom for Mosaic internal scratch on v7x (64 MiB)
    # while unlocking larger tiles on v5e / v6e (128 MiB).
    return int(_vmem_capacity_bytes() * 0.7)


def _default_tile_targets():
    """(proj_seq_tile, q_tile, kv_tile) targets scaled to this generation's VMEM."""
    if _vmem_capacity_bytes() >= 100 * 1024 * 1024:   # v5e / v6e: 128 MiB VMEM
        return 512, 512, 1024
    return 256, 256, 512                              # v7x: 64 MiB VMEM


@functools.lru_cache(maxsize=None)
def _buffered_single_supported() -> bool:
    """Probe (once) whether BlockSpec(pipeline_mode=pl.Buffered(1)) works here."""
    if not hasattr(pl, "Buffered"):
        return False
    try:
        def _probe(x_ref, o_ref):
            o_ref[...] = x_ref[...] + 1.0

        fn = pl.pallas_call(
            _probe,
            out_shape=jax.ShapeDtypeStruct((8, 128), jnp.float32),
            grid=(2,),
            in_specs=[pl.BlockSpec((8, 128), lambda i: (0, 0),
                                   pipeline_mode=pl.Buffered(1))],
            out_specs=pl.BlockSpec((8, 128), lambda i: (0, 0)),
        )
        jax.block_until_ready(fn(jnp.zeros((8, 128), jnp.float32)))
        return True
    except Exception:  # noqa: BLE001 - any rejection -> default double buffering
        return False


def _reused_spec(block_shape, index_map):
    """Spec for a block identical at every grid step (weights / biases).

    Fetched once and revisited either way; single-buffered when supported so the
    resident copy costs 1x (not 2x) VMEM — matters for the (D, 3D) QKV weight on
    v7x's 64 MiB VMEM."""
    if _buffered_single_supported():
        return pl.BlockSpec(block_shape, index_map, pipeline_mode=pl.Buffered(1))
    return pl.BlockSpec(block_shape, index_map)


def _seq_tile(n: int, target: int, align: int) -> int:
    """Largest tile <= target dividing n with tile % align == 0 (falling back to
    8-alignment, then to the whole dimension as a single tile)."""
    if n <= target:
        return n
    for req in (align, 8):
        t = target - target % req
        while t >= req:
            if n % t == 0:
                return t
            t -= req
    # TODO(synk): awkward sequence lengths fall back to a single full-length tile,
    # which can exceed the VMEM budget for very long sequences.
    return n


def _head_group(n_head: int, d_head: int) -> int:
    """Heads per attention grid step, chosen so the lane width g*d_head is a
    multiple of 128 (lane-dense blocks & stores); falls back to all heads."""
    for g in range(1, n_head + 1):
        if n_head % g == 0 and (g * d_head) % 128 == 0:
            return g
    return n_head


# ---------------------------------------------------------------------------
# Kernel 1: fused QKV projection.
#   y = x @ [Wq*s | Wk*s | Wv] + [bq*s | 0 | bv]  ->  q, k, v as (B, T, D) bf16.
# ---------------------------------------------------------------------------
def _qkv_proj_kernel(x_ref, w_ref, b_ref, q_ref, k_ref, v_ref, *, d_model):
    y = jnp.dot(x_ref[...], w_ref[...],
                preferred_element_type=jnp.float32) + b_ref[...]      # (bt, 3D) f32
    q_ref[...] = y[:, :d_model].astype(q_ref.dtype)                   # lane-dense stores
    k_ref[...] = y[:, d_model:2 * d_model].astype(k_ref.dtype)
    v_ref[...] = y[:, 2 * d_model:].astype(v_ref.dtype)


def _qkv_projection(x, wqkv, bqkv, *, seq_tile):
    B, T, D = x.shape
    bt = seq_tile
    out = jax.ShapeDtypeStruct((B, T, D), jnp.bfloat16)
    seq_spec = pl.BlockSpec((None, bt, D), lambda b, t: (b, t, 0))
    cost = pl.CostEstimate(
        flops=2 * B * T * D * 3 * D,
        transcendentals=0,
        bytes_accessed=B * T * D * 2 + D * 3 * D * 2 + 3 * D * 4 + 3 * B * T * D * 2)
    return pl.pallas_call(
        functools.partial(_qkv_proj_kernel, d_model=D),
        out_shape=(out, out, out),
        grid_spec=pltpu.PrefetchScalarGridSpec(
            num_scalar_prefetch=0,
            grid=(B, T // bt),
            in_specs=[
                seq_spec,
                _reused_spec((D, 3 * D), lambda b, t: (0, 0)),   # resident weight
                _reused_spec((1, 3 * D), lambda b, t: (0, 0)),   # resident bias
            ],
            out_specs=(seq_spec, seq_spec, seq_spec),
        ),
        compiler_params=pltpu.CompilerParams(
            dimension_semantics=("parallel", "parallel"),
            vmem_limit_bytes=_vmem_limit_bytes()),
        cost_estimate=cost,
    )(x, wqkv, bqkv)
    # TODO(synk): for very large D (>= ~2K on v7x) add a Dout grid axis so the fused
    # weight streams in (D, tn) tiles instead of residing fully in VMEM.


# ---------------------------------------------------------------------------
# Kernel 2: flash attention over lane-dense head groups.
#   grid = (B, H//G, q_tiles, kv_tiles); every block is (tile, G*dh).
#   q/k arrive pre-scaled (d_head**-0.25 folded into the projection weights).
# ---------------------------------------------------------------------------
def _flash_kernel(q_ref, k_ref, v_ref, o_ref, m_sc, l_sc, acc_sc, *, d_head, heads):
    ki = pl.program_id(3)

    @pl.when(ki == 0)
    def _():
        m_sc[...] = jnp.full(m_sc.shape, -jnp.inf, m_sc.dtype)
        l_sc[...] = jnp.zeros(l_sc.shape, l_sc.dtype)
        acc_sc[...] = jnp.zeros(acc_sc.shape, acc_sc.dtype)

    q = q_ref[...]              # (tq, heads*dh) bf16
    k = k_ref[...]              # (tk, heads*dh) bf16
    v = v_ref[...]              # (tk, heads*dh) bf16
    m_prev = m_sc[...]          # (tq, heads) f32
    l_prev = l_sc[...]          # (tq, heads) f32
    acc_prev = acc_sc[...]      # (tq, heads*dh) f32

    m_cols, l_cols, acc_cols = [], [], []
    for h in range(heads):      # unrolled per-head online softmax
        lo, hi = h * d_head, (h + 1) * d_head
        # scores_h = q_h @ k_h^T (contract last dims; no materialized transpose).
        # TODO(synk): if the bundle shows a per-step vxpose on the K operand, emit
        # K pre-transposed as (B, D, T) from the projection kernel instead.
        s = jax.lax.dot_general(q[:, lo:hi], k[:, lo:hi],
                                (((1,), (1,)), ((), ())),
                                preferred_element_type=jnp.float32)   # (tq, tk)
        m_h = m_prev[:, h:h + 1]
        m_new = jnp.maximum(m_h, jnp.max(s, axis=-1, keepdims=True))
        alpha = jnp.exp(m_h - m_new)
        p = jnp.exp(s - m_new)
        l_cols.append(alpha * l_prev[:, h:h + 1] + jnp.sum(p, axis=-1, keepdims=True))
        acc_cols.append(alpha * acc_prev[:, lo:hi] +
                        jnp.dot(p.astype(v.dtype), v[:, lo:hi],
                                preferred_element_type=jnp.float32))
        m_cols.append(m_new)

    m_sc[...] = jnp.concatenate(m_cols, axis=1)
    l_sc[...] = jnp.concatenate(l_cols, axis=1)
    acc_sc[...] = jnp.concatenate(acc_cols, axis=1)

    @pl.when(ki == pl.num_programs(3) - 1)
    def _():
        inv = pl.reciprocal(l_sc[...], approx=True)                   # (tq, heads)
        acc = acc_sc[...]
        out = jnp.concatenate(
            [acc[:, h * d_head:(h + 1) * d_head] * inv[:, h:h + 1]
             for h in range(heads)], axis=1)
        o_ref[...] = out.astype(o_ref.dtype)                          # lane-dense store


def _flash_attention(q, k, v, *, n_head, d_head, tq, tk):
    """q, k, v: (B, T, D) bf16 with head h in lanes [h*dh, (h+1)*dh) -> ctx (B, T, D)."""
    B, T, D = q.shape
    gh = _head_group(n_head, d_head)
    lanes = gh * d_head
    grid = (B, n_head // gh, T // tq, T // tk)
    q_spec = pl.BlockSpec((None, tq, lanes), lambda b, g, qi, ki: (b, qi, g))
    kv_spec = pl.BlockSpec((None, tk, lanes), lambda b, g, qi, ki: (b, ki, g))
    cost = pl.CostEstimate(
        flops=4 * B * n_head * T * T * d_head,
        transcendentals=B * n_head * T * T,
        bytes_accessed=2 * B * T * D * 2 + 2 * B * T * D * 2 * (T // tq))
    return pl.pallas_call(
        functools.partial(_flash_kernel, d_head=d_head, heads=gh),
        out_shape=jax.ShapeDtypeStruct((B, T, D), q.dtype),
        grid_spec=pltpu.PrefetchScalarGridSpec(
            num_scalar_prefetch=0,
            grid=grid,
            in_specs=[q_spec, kv_spec, kv_spec],
            out_specs=q_spec,
            scratch_shapes=[
                pltpu.VMEM((tq, gh), jnp.float32),      # running max per head
                pltpu.VMEM((tq, gh), jnp.float32),      # running denom per head
                pltpu.VMEM((tq, lanes), jnp.float32),   # running unnormalized output
            ],
        ),
        compiler_params=pltpu.CompilerParams(
            dimension_semantics=("parallel", "parallel", "parallel", "arbitrary"),
            vmem_limit_bytes=_vmem_limit_bytes()),
        cost_estimate=cost,
    )(q, k, v)


# ---------------------------------------------------------------------------
# Kernel 3: output projection, y = ctx @ Wo + bo.
# ---------------------------------------------------------------------------
def _out_proj_kernel(x_ref, w_ref, b_ref, o_ref):
    y = jnp.dot(x_ref[...], w_ref[...],
                preferred_element_type=jnp.float32) + b_ref[...]
    o_ref[...] = y.astype(o_ref.dtype)


def _out_projection(x, w, b, *, out_dtype, seq_tile):
    B, T, D = x.shape
    Dout = w.shape[1]
    bt = seq_tile
    cost = pl.CostEstimate(
        flops=2 * B * T * D * Dout,
        transcendentals=0,
        bytes_accessed=B * T * D * 2 + D * Dout * 2 + Dout * 4 + B * T * Dout * 4)
    return pl.pallas_call(
        _out_proj_kernel,
        out_shape=jax.ShapeDtypeStruct((B, T, Dout), out_dtype),
        grid_spec=pltpu.PrefetchScalarGridSpec(
            num_scalar_prefetch=0,
            grid=(B, T // bt),
            in_specs=[
                pl.BlockSpec((None, bt, D), lambda b, t: (b, t, 0)),
                _reused_spec((D, Dout), lambda b, t: (0, 0)),
                _reused_spec((1, Dout), lambda b, t: (0, 0)),
            ],
            out_specs=pl.BlockSpec((None, bt, Dout), lambda b, t: (b, t, 0)),
        ),
        compiler_params=pltpu.CompilerParams(
            dimension_semantics=("parallel", "parallel"),
            vmem_limit_bytes=_vmem_limit_bytes()),
        cost_estimate=cost,
    )(x, w, b)


# ---------------------------------------------------------------------------
# Full forward pass (matches the PyTorch module with mask=None).
# ---------------------------------------------------------------------------
def multi_head_self_attention(x, params, *, n_head: int,
                              q_tile_target=None, kv_tile_target=None,
                              proj_tile_target=None):
    """x: (B, T, n_state) f32.  params: dict of weights stored as (in, out)."""
    B, T, D = x.shape
    dh = D // n_head
    scale = float(dh) ** (-0.25)

    proj_def, q_def, kv_def = _default_tile_targets()
    proj_tile_target = proj_tile_target or proj_def
    q_tile_target = q_tile_target or q_def
    kv_tile_target = kv_tile_target or kv_def

    # Offline weight transform: fold d_head**-0.25 into Wq/bq/Wk, fuse QKV into one
    # (D, 3D) matrix, and pre-cast MXU operands to bf16 (f32 accumulation in-kernel).
    wqkv = jnp.concatenate(
        [params["wq"] * scale, params["wk"] * scale, params["wv"]],
        axis=1).astype(jnp.bfloat16)
    bqkv = jnp.concatenate(
        [params["bq"] * scale, jnp.zeros((1, D), jnp.float32), params["bv"]],
        axis=1).astype(jnp.float32)                 # key projection has no bias
    wo = params["wo"].astype(jnp.bfloat16)
    bo = params["bo"].astype(jnp.float32)

    bt = _seq_tile(T, proj_tile_target, 16)
    tq = _seq_tile(T, q_tile_target, 16)            # bf16 sublane-pair aligned
    tk = _seq_tile(T, kv_tile_target, 128)          # lane dim of the score tile

    # 1) Fused QKV projection -> q, k, v each (B, T, D) bf16 (q/k pre-scaled),
    #    head h in lanes [h*dh, (h+1)*dh).  No wrapper-side reshuffles anywhere.
    q, k, v = _qkv_projection(x.astype(jnp.bfloat16), wqkv, bqkv, seq_tile=bt)

    # 2) Flash attention with lane-dense head groups; context written as (B, T, D).
    ctx = _flash_attention(q, k, v, n_head=n_head, d_head=dh, tq=tq, tk=tk)

    # 3) Output projection directly on the attention output layout.
    return _out_projection(ctx, wo, bo, out_dtype=x.dtype, seq_tile=bt)
    # TODO(synk): optional additive attention `mask` argument not implemented
    # (the PyTorch forward default is mask=None).


def reference_mhsa(x, params, *, n_head: int):
    """Pure-JAX f32 reference mirroring the PyTorch forward (mask=None)."""
    B, T, D = x.shape
    d_head = D // n_head
    q = x @ params["wq"] + params["bq"][0]
    k = x @ params["wk"]
    v = x @ params["wv"] + params["bv"][0]
    scale = d_head ** (-0.25)
    q = q.reshape(B, T, n_head, d_head).transpose(0, 2, 1, 3) * scale
    k = k.reshape(B, T, n_head, d_head).transpose(0, 2, 3, 1) * scale
    v = v.reshape(B, T, n_head, d_head).transpose(0, 2, 1, 3)
    qk = q @ k
    p = jax.nn.softmax(qk, axis=-1)
    qkv = (p @ v).transpose(0, 2, 1, 3).reshape(B, T, D)
    return qkv @ params["wo"] + params["bo"][0]


if __name__ == "__main__":
    # Small shapes consistent with the module: batch=2, seq=8, n_state=32, n_head=4
    B, T, n_state, n_head = 2, 8, 32, 4

    key = jax.random.PRNGKey(0)
    ks = jax.random.split(key, 8)
    init = lambda k, shape: (jax.random.normal(k, shape, jnp.float32) * 0.05)

    # Linear weights stored transposed: (in_features, out_features), so y = x @ W + b
    params = {
        "wq": init(ks[0], (n_state, n_state)),
        "bq": init(ks[1], (1, n_state)),
        "wk": init(ks[2], (n_state, n_state)),   # key: bias=False
        "wv": init(ks[3], (n_state, n_state)),
        "bv": init(ks[4], (1, n_state)),
        "wo": init(ks[5], (n_state, n_state)),
        "bo": init(ks[6], (1, n_state)),
    }
    x = jax.random.normal(ks[7], (B, T, n_state), jnp.float32)

    mhsa = jax.jit(functools.partial(multi_head_self_attention, n_head=n_head))
    out = jax.block_until_ready(mhsa(x, params))

    ref = reference_mhsa(x, params, n_head=n_head)
    assert out.shape == (B, T, n_state)
    # bf16 MXU operands + approx softmax reciprocal -> slightly loosened tolerance.
    assert jnp.allclose(out, ref, atol=2e-2, rtol=2e-2), "mismatch vs pure-JAX reference"

    print("KERNEL_OK")
</pallas_src>

<mosaic_0001>
module attributes {stable_mosaic.version = 11 : i64} {
  func.func @_flash_kernel(%arg0: i32, %arg1: i32, %arg2: i32, %arg3: i32, %arg4: memref<1x8x32xbf16, #tpu.memory_space<vmem>>, %arg5: memref<1x8x32xbf16, #tpu.memory_space<vmem>>, %arg6: memref<1x8x32xbf16, #tpu.memory_space<vmem>>, %arg7: memref<1x8x32xbf16, #tpu.memory_space<vmem>>, %arg8: memref<8x4xf32, #tpu.memory_space<vmem>>, %arg9: memref<8x4xf32, #tpu.memory_space<vmem>>, %arg10: memref<8x32xf32, #tpu.memory_space<vmem>>) attributes {dimension_semantics = [#tpu.dimension_semantics<parallel>, #tpu.dimension_semantics<parallel>, #tpu.dimension_semantics<parallel>, #tpu.dimension_semantics<arbitrary>], iteration_bounds = array<i64: 2, 1, 1, 1>, scalar_prefetch = 0 : i64, scratch_operands = 3 : i64, tpu.core_type = #tpu.core_type<tc>, window_params = [{transform_indices = @transform_0, window_bounds = array<i64: 1, 8, 32>}, {transform_indices = @transform_1, window_bounds = array<i64: 1, 8, 32>}, {transform_indices = @transform_2, window_bounds = array<i64: 1, 8, 32>}, {transform_indices = @transform_3, window_bounds = array<i64: 1, 8, 32>}]} {
    %c0_i32 = arith.constant 0 : i32
    %0 = arith.cmpi eq, %arg3, %c0_i32 : i32
    %1 = arith.extui %0 : i1 to i32
    %c0_i32_0 = arith.constant 0 : i32
    %2 = arith.cmpi ne, %1, %c0_i32_0 : i32
    scf.if %2 {
      %cst_38 = arith.constant 0xFF800000 : f32
      %117 = vector.broadcast %cst_38 : f32 to vector<8x4xf32>
      %c0_39 = arith.constant 0 : index
      %c0_40 = arith.constant 0 : index
      %118 = vector.load %arg8[%c0_39, %c0_40] : memref<8x4xf32, #tpu.memory_space<vmem>>, vector<8x4xf32>
      tpu.vector_store %arg8[%c0_39, %c0_40], %117 {strides = array<i32>} : memref<8x4xf32, #tpu.memory_space<vmem>>, vector<8x4xf32>,
      %cst_41 = arith.constant 0.000000e+00 : f32
      %119 = vector.broadcast %cst_41 : f32 to vector<8x4xf32>
      %c0_42 = arith.constant 0 : index
      %c0_43 = arith.constant 0 : index
      %120 = vector.load %arg9[%c0_42, %c0_43] : memref<8x4xf32, #tpu.memory_space<vmem>>, vector<8x4xf32>
      tpu.vector_store %arg9[%c0_42, %c0_43], %119 {strides = array<i32>} : memref<8x4xf32, #tpu.memory_space<vmem>>, vector<8x4xf32>,
      %cst_44 = arith.constant 0.000000e+00 : f32
      %121 = vector.broadcast %cst_44 : f32 to vector<8x32xf32>
      %c0_45 = arith.constant 0 : index
      %c0_46 = arith.constant 0 : index
      %122 = vector.load %arg10[%c0_45, %c0_46] : memref<8x32xf32, #tpu.memory_space<vmem>>, vector<8x32xf32>
      tpu.vector_store %arg10[%c0_45, %c0_46], %121 {strides = array<i32>} : memref<8x32xf32, #tpu.memory_space<vmem>>, vector<8x32xf32>,
    } else {
    }
    %c0 = arith.constant 0 : index
    %c0_1 = arith.constant 0 : index
    %c0_2 = arith.constant 0 : index
    %3 = vector.load %arg4[%c0, %c0_1, %c0_2] : memref<1x8x32xbf16, #tpu.memory_space<vmem>>, vector<1x8x32xbf16>
    %4 = vector.shape_cast %3 : vector<1x8x32xbf16> to vector<8x32xbf16>
    %c0_3 = arith.constant 0 : index
    %c0_4 = arith.constant 0 : index
    %c0_5 = arith.constant 0 : index
    %5 = vector.load %arg5[%c0_3, %c0_4, %c0_5] : memref<1x8x32xbf16, #tpu.memory_space<vmem>>, vector<1x8x32xbf16>
    %6 = vector.shape_cast %5 : vector<1x8x32xbf16> to vector<8x32xbf16>
    %c0_6 = arith.constant 0 : index
    %c0_7 = arith.constant 0 : index
    %c0_8 = arith.constant 0 : index
    %7 = vector.load %arg6[%c0_6, %c0_7, %c0_8] : memref<1x8x32xbf16, #tpu.memory_space<vmem>>, vector<1x8x32xbf16>
    %8 = vector.shape_cast %7 : vector<1x8x32xbf16> to vector<8x32xbf16>
    %c0_9 = arith.constant 0 : index
    %c0_10 = arith.constant 0 : index
    %9 = vector.load %arg8[%c0_9, %c0_10] : memref<8x4xf32, #tpu.memory_space<vmem>>, vector<8x4xf32>
    %c0_11 = arith.constant 0 : index
    %c0_12 = arith.constant 0 : index
    %10 = vector.load %arg9[%c0_11, %c0_12] : memref<8x4xf32, #tpu.memory_space<vmem>>, vector<8x4xf32>
    %c0_13 = arith.constant 0 : index
    %c0_14 = arith.constant 0 : index
    %11 = vector.load %arg10[%c0_13, %c0_14] : memref<8x32xf32, #tpu.memory_space<vmem>>, vector<8x32xf32>
    %12 = vector.extract_strided_slice %4 {offsets = [0, 0], sizes = [8, 8], strides = [1, 1]} : vector<8x32xbf16> to vector<8x8xbf16>
    %13 = vector.extract_strided_slice %6 {offsets = [0, 0], sizes = [8, 8], strides = [1, 1]} : vector<8x32xbf16> to vector<8x8xbf16>
    %cst = arith.constant dense<0.000000e+00> : vector<8x8xf32>
    %14 = tpu.matmul %12, %13, %cst {dimension_numbers = #tpu.dot_dimension_numbers<[1], [1], [0], [0], [0, 0, 1, 0], [], []>} : vector<8x8xbf16>, vector<8x8xbf16>, vector<8x8xf32> -> vector<8x8xf32>
    %15 = vector.extract_strided_slice %9 {offsets = [0, 0], sizes = [8, 1], strides = [1, 1]} : vector<8x4xf32> to vector<8x1xf32>
    %cst_15 = arith.constant dense<0xFF800000> : vector<8xf32>
    %16 = vector.multi_reduction <maximumf>, %14, %cst_15 [1] : vector<8x8xf32> to vector<8xf32>
    %17 = vector.shape_cast %16 : vector<8xf32> to vector<8x1xf32>
    %18 = arith.maximumf %15, %17 : vector<8x1xf32>
    %19 = arith.subf %15, %18 : vector<8x1xf32>
    %20 = math.exp %19 : vector<8x1xf32>
    %21 = vector.broadcast %18 : vector<8x1xf32> to vector<8x8xf32>
    %22 = arith.subf %14, %21 : vector<8x8xf32>
    %23 = math.exp %22 : vector<8x8xf32>
    %24 = vector.extract_strided_slice %10 {offsets = [0, 0], sizes = [8, 1], strides = [1, 1]} : vector<8x4xf32> to vector<8x1xf32>
    %25 = arith.mulf %20, %24 : vector<8x1xf32>
    %cst_16 = arith.constant dense<0.000000e+00> : vector<8xf32>
    %26 = vector.multi_reduction <add>, %23, %cst_16 [1] : vector<8x8xf32> to vector<8xf32>
    %27 = vector.shape_cast %26 : vector<8xf32> to vector<8x1xf32>
    %28 = arith.addf %25, %27 : vector<8x1xf32>
    %29 = vector.extract_strided_slice %11 {offsets = [0, 0], sizes = [8, 8], strides = [1, 1]} : vector<8x32xf32> to vector<8x8xf32>
    %30 = vector.broadcast %20 : vector<8x1xf32> to vector<8x8xf32>
    %31 = arith.mulf %30, %29 : vector<8x8xf32>
    %32 = arith.truncf %23 : vector<8x8xf32> to vector<8x8xbf16>
    %33 = vector.extract_strided_slice %8 {offsets = [0, 0], sizes = [8, 8], strides = [1, 1]} : vector<8x32xbf16> to vector<8x8xbf16>
    %cst_17 = arith.constant dense<0.000000e+00> : vector<8x8xf32>
    %34 = tpu.matmul %32, %33, %cst_17 {dimension_numbers = #tpu.dot_dimension_numbers<[1], [0], [0], [1], [0, 0, 1, 1], [], []>} : vector<8x8xbf16>, vector<8x8xbf16>, vector<8x8xf32> -> vector<8x8xf32>
    %35 = arith.addf %31, %34 : vector<8x8xf32>
    %36 = vector.extract_strided_slice %4 {offsets = [0, 8], sizes = [8, 8], strides = [1, 1]} : vector<8x32xbf16> to vector<8x8xbf16>
    %37 = vector.extract_strided_slice %6 {offsets = [0, 8], sizes = [8, 8], strides = [1, 1]} : vector<8x32xbf16> to vector<8x8xbf16>
    %cst_18 = arith.constant dense<0.000000e+00> : vector<8x8xf32>
    %38 = tpu.matmul %36, %37, %cst_18 {dimension_numbers = #tpu.dot_dimension_numbers<[1], [1], [0], [0], [0, 0, 1, 0], [], []>} : vector<8x8xbf16>, vector<8x8xbf16>, vector<8x8xf32> -> vector<8x8xf32>
    %39 = vector.extract_strided_slice %9 {offsets = [0, 1], sizes = [8, 1], strides = [1, 1]} : vector<8x4xf32> to vector<8x1xf32>
    %cst_19 = arith.constant dense<0xFF800000> : vector<8xf32>
    %40 = vector.multi_reduction <maximumf>, %38, %cst_19 [1] : vector<8x8xf32> to vector<8xf32>
    %41 = vector.shape_cast %40 : vector<8xf32> to vector<8x1xf32>
    %42 = arith.maximumf %39, %41 : vector<8x1xf32>
    %43 = arith.subf %39, %42 : vector<8x1xf32>
    %44 = math.exp %43 : vector<8x1xf32>
    %45 = vector.broadcast %42 : vector<8x1xf32> to vector<8x8xf32>
    %46 = arith.subf %38, %45 : vector<8x8xf32>
    %47 = math.exp %46 : vector<8x8xf32>
    %48 = vector.extract_strided_slice %10 {offsets = [0, 1], sizes = [8, 1], strides = [1, 1]} : vector<8x4xf32> to vector<8x1xf32>
    %49 = arith.mulf %44, %48 : vector<8x1xf32>
    %cst_20 = arith.constant dense<0.000000e+00> : vector<8xf32>
    %50 = vector.multi_reduction <add>, %47, %cst_20 [1] : vector<8x8xf32> to vector<8xf32>
    %51 = vector.shape_cast %50 : vector<8xf32> to vector<8x1xf32>
    %52 = arith.addf %49, %51 : vector<8x1xf32>
    %53 = vector.extract_strided_slice %11 {offsets = [0, 8], sizes = [8, 8], strides = [1, 1]} : vector<8x32xf32> to vector<8x8xf32>
    %54 = vector.broadcast %44 : vector<8x1xf32> to vector<8x8xf32>
    %55 = arith.mulf %54, %53 : vector<8x8xf32>
    %56 = arith.truncf %47 : vector<8x8xf32> to vector<8x8xbf16>
    %57 = vector.extract_strided_slice %8 {offsets = [0, 8], sizes = [8, 8], strides = [1, 1]} : vector<8x32xbf16> to vector<8x8xbf16>
    %cst_21 = arith.constant dense<0.000000e+00> : vector<8x8xf32>
    %58 = tpu.matmul %56, %57, %cst_21 {dimension_numbers = #tpu.dot_dimension_numbers<[1], [0], [0], [1], [0, 0, 1, 1], [], []>} : vector<8x8xbf16>, vector<8x8xbf16>, vector<8x8xf32> -> vector<8x8xf32>
    %59 = arith.addf %55, %58 : vector<8x8xf32>
    %60 = vector.extract_strided_slice %4 {offsets = [0, 16], sizes = [8, 8], strides = [1, 1]} : vector<8x32xbf16> to vector<8x8xbf16>
    %61 = vector.extract_strided_slice %6 {offsets = [0, 16], sizes = [8, 8], strides = [1, 1]} : vector<8x32xbf16> to vector<8x8xbf16>
    %cst_22 = arith.constant dense<0.000000e+00> : vector<8x8xf32>
    %62 = tpu.matmul %60, %61, %cst_22 {dimension_numbers = #tpu.dot_dimension_numbers<[1], [1], [0], [0], [0, 0, 1, 0], [], []>} : vector<8x8xbf16>, vector<8x8xbf16>, vector<8x8xf32> -> vector<8x8xf32>
    %63 = vector.extract_strided_slice %9 {offsets = [0, 2], sizes = [8, 1], strides = [1, 1]} : vector<8x4xf32> to vector<8x1xf32>
    %cst_23 = arith.constant dense<0xFF800000> : vector<8xf32>
    %64 = vector.multi_reduction <maximumf>, %62, %cst_23 [1] : vector<8x8xf32> to vector<8xf32>
    %65 = vector.shape_cast %64 : vector<8xf32> to vector<8x1xf32>
    %66 = arith.maximumf %63, %65 : vector<8x1xf32>
    %67 = arith.subf %63, %66 : vector<8x1xf32>
    %68 = math.exp %67 : vector<8x1xf32>
    %69 = vector.broadcast %66 : vector<8x1xf32> to vector<8x8xf32>
    %70 = arith.subf %62, %69 : vector<8x8xf32>
    %71 = math.exp %70 : vector<8x8xf32>
    %72 = vector.extract_strided_slice %10 {offsets = [0, 2], sizes = [8, 1], strides = [1, 1]} : vector<8x4xf32> to vector<8x1xf32>
    %73 = arith.mulf %68, %72 : vector<8x1xf32>
    %cst_24 = arith.constant dense<0.000000e+00> : vector<8xf32>
    %74 = vector.multi_reduction <add>, %71, %cst_24 [1] : vector<8x8xf32> to vector<8xf32>
    %75 = vector.shape_cast %74 : vector<8xf32> to vector<8x1xf32>
    %76 = arith.addf %73, %75 : vector<8x1xf32>
    %77 = vector.extract_strided_slice %11 {offsets = [0, 16], sizes = [8, 8], strides = [1, 1]} : vector<8x32xf32> to vector<8x8xf32>
    %78 = vector.broadcast %68 : vector<8x1xf32> to vector<8x8xf32>
    %79 = arith.mulf %78, %77 : vector<8x8xf32>
    %80 = arith.truncf %71 : vector<8x8xf32> to vector<8x8xbf16>
    %81 = vector.extract_strided_slice %8 {offsets = [0, 16], sizes = [8, 8], strides = [1, 1]} : vector<8x32xbf16> to vector<8x8xbf16>
    %cst_25 = arith.constant dense<0.000000e+00> : vector<8x8xf32>
    %82 = tpu.matmul %80, %81, %cst_25 {dimension_numbers = #tpu.dot_dimension_numbers<[1], [0], [0], [1], [0, 0, 1, 1], [], []>} : vector<8x8xbf16>, vector<8x8xbf16>, vector<8x8xf32> -> vector<8x8xf32>
    %83 = arith.addf %79, %82 : vector<8x8xf32>
    %84 = vector.extract_strided_slice %4 {offsets = [0, 24], sizes = [8, 8], strides = [1, 1]} : vector<8x32xbf16> to vector<8x8xbf16>
    %85 = vector.extract_strided_slice %6 {offsets = [0, 24], sizes = [8, 8], strides = [1, 1]} : vector<8x32xbf16> to vector<8x8xbf16>
    %cst_26 = arith.constant dense<0.000000e+00> : vector<8x8xf32>
    %86 = tpu.matmul %84, %85, %cst_26 {dimension_numbers = #tpu.dot_dimension_numbers<[1], [1], [0], [0], [0, 0, 1, 0], [], []>} : vector<8x8xbf16>, vector<8x8xbf16>, vector<8x8xf32> -> vector<8x8xf32>
    %87 = vector.extract_strided_slice %9 {offsets = [0, 3], sizes = [8, 1], strides = [1, 1]} : vector<8x4xf32> to vector<8x1xf32>
    %cst_27 = arith.constant dense<0xFF800000> : vector<8xf32>
    %88 = vector.multi_reduction <maximumf>, %86, %cst_27 [1] : vector<8x8xf32> to vector<8xf32>
    %89 = vector.shape_cast %88 : vector<8xf32> to vector<8x1xf32>
    %90 = arith.maximumf %87, %89 : vector<8x1xf32>
    %91 = arith.subf %87, %90 : vector<8x1xf32>
    %92 = math.exp %91 : vector<8x1xf32>
    %93 = vector.broadcast %90 : vector<8x1xf32> to vector<8x8xf32>
    %94 = arith.subf %86, %93 : vector<8x8xf32>
    %95 = math.exp %94 : vector<8x8xf32>
    %96 = vector.extract_strided_slice %10 {offsets = [0, 3], sizes = [8, 1], strides = [1, 1]} : vector<8x4xf32> to vector<8x1xf32>
    %97 = arith.mulf %92, %96 : vector<8x1xf32>
    %cst_28 = arith.constant dense<0.000000e+00> : vector<8xf32>
    %98 = vector.multi_reduction <add>, %95, %cst_28 [1] : vector<8x8xf32> to vector<8xf32>
    %99 = vector.shape_cast %98 : vector<8xf32> to vector<8x1xf32>
    %100 = arith.addf %97, %99 : vector<8x1xf32>
    %101 = vector.extract_strided_slice %11 {offsets = [0, 24], sizes = [8, 8], strides = [1, 1]} : vector<8x32xf32> to vector<8x8xf32>
    %102 = vector.broadcast %92 : vector<8x1xf32> to vector<8x8xf32>
    %103 = arith.mulf %102, %101 : vector<8x8xf32>
    %104 = arith.truncf %95 : vector<8x8xf32> to vector<8x8xbf16>
    %105 = vector.extract_strided_slice %8 {offsets = [0, 24], sizes = [8, 8], strides = [1, 1]} : vector<8x32xbf16> to vector<8x8xbf16>
    %cst_29 = arith.constant dense<0.000000e+00> : vector<8x8xf32>
    %106 = tpu.matmul %104, %105, %cst_29 {dimension_numbers = #tpu.dot_dimension_numbers<[1], [0], [0], [1], [0, 0, 1, 1], [], []>} : vector<8x8xbf16>, vector<8x8xbf16>, vector<8x8xf32> -> vector<8x8xf32>
    %107 = arith.addf %103, %106 : vector<8x8xf32>
    %108 = tpu.concatenate %18, %42, %66, %90 in 1 : vector<8x1xf32>, vector<8x1xf32>, vector<8x1xf32>, vector<8x1xf32> -> vector<8x4xf32>
    %c0_30 = arith.constant 0 : index
    %c0_31 = arith.constant 0 : index
    %109 = vector.load %arg8[%c0_30, %c0_31] : memref<8x4xf32, #tpu.memory_space<vmem>>, vector<8x4xf32>
    tpu.vector_store %arg8[%c0_30, %c0_31], %108 {strides = array<i32>} : memref<8x4xf32, #tpu.memory_space<vmem>>, vector<8x4xf32>,
    %110 = tpu.concatenate %28, %52, %76, %100 in 1 : vector<8x1xf32>, vector<8x1xf32>, vector<8x1xf32>, vector<8x1xf32> -> vector<8x4xf32>
    %c0_32 = arith.constant 0 : index
    %c0_33 = arith.constant 0 : index
    %111 = vector.load %arg9[%c0_32, %c0_33] : memref<8x4xf32, #tpu.memory_space<vmem>>, vector<8x4xf32>
    tpu.vector_store %arg9[%c0_32, %c0_33], %110 {strides = array<i32>} : memref<8x4xf32, #tpu.memory_space<vmem>>, vector<8x4xf32>,
    %112 = tpu.concatenate %35, %59, %83, %107 in 1 : vector<8x8xf32>, vector<8x8xf32>, vector<8x8xf32>, vector<8x8xf32> -> vector<8x32xf32>
    %c0_34 = arith.constant 0 : index
    %c0_35 = arith.constant 0 : index
    %113 = vector.load %arg10[%c0_34, %c0_35] : memref<8x32xf32, #tpu.memory_space<vmem>>, vector<8x32xf32>
    tpu.vector_store %arg10[%c0_34, %c0_35], %112 {strides = array<i32>} : memref<8x32xf32, #tpu.memory_space<vmem>>, vector<8x32xf32>,
    %c0_i32_36 = arith.constant 0 : i32
    %114 = arith.cmpi eq, %arg3, %c0_i32_36 : i32
    %115 = arith.extui %114 : i1 to i32
    %c0_i32_37 = arith.constant 0 : i32
    %116 = arith.cmpi ne, %115, %c0_i32_37 : i32
    scf.if %116 {
      %c0_38 = arith.constant 0 : index
      %c0_39 = arith.constant 0 : index
      %117 = vector.load %arg9[%c0_38, %c0_39] : memref<8x4xf32, #tpu.memory_space<vmem>>, vector<8x4xf32>
      %118 = tpu.reciprocal %117 {approx = true} : vector<8x4xf32> -> vector<8x4xf32>
      %c0_40 = arith.constant 0 : index
      %c0_41 = arith.constant 0 : index
      %119 = vector.load %arg10[%c0_40, %c0_41] : memref<8x32xf32, #tpu.memory_space<vmem>>, vector<8x32xf32>
      %120 = vector.extract_strided_slice %119 {offsets = [0, 0], sizes = [8, 8], strides = [1, 1]} : vector<8x32xf32> to vector<8x8xf32>
      %121 = vector.extract_strided_slice %118 {offsets = [0, 0], sizes = [8, 1], strides = [1, 1]} : vector<8x4xf32> to vector<8x1xf32>
      %122 = vector.broadcast %121 : vector<8x1xf32> to vector<8x8xf32>
      %123 = arith.mulf %120, %122 : vector<8x8xf32>
      %124 = vector.extract_strided_slice %119 {offsets = [0, 8], sizes = [8, 8], strides = [1, 1]} : vector<8x32xf32> to vector<8x8xf32>
      %125 = vector.extract_strided_slice %118 {offsets = [0, 1], sizes = [8, 1], strides = [1, 1]} : vector<8x4xf32> to vector<8x1xf32>
      %126 = vector.broadcast %125 : vector<8x1xf32> to vector<8x8xf32>
      %127 = arith.mulf %124, %126 : vector<8x8xf32>
      %128 = vector.extract_strided_slice %119 {offsets = [0, 16], sizes = [8, 8], strides = [1, 1]} : vector<8x32xf32> to vector<8x8xf32>
      %129 = vector.extract_strided_slice %118 {offsets = [0, 2], sizes = [8, 1], strides = [1, 1]} : vector<8x4xf32> to vector<8x1xf32>
      %130 = vector.broadcast %129 : vector<8x1xf32> to vector<8x8xf32>
      %131 = arith.mulf %128, %130 : vector<8x8xf32>
      %132 = vector.extract_strided_slice %119 {offsets = [0, 24], sizes = [8, 8], strides = [1, 1]} : vector<8x32xf32> to vector<8x8xf32>
      %133 = vector.extract_strided_slice %118 {offsets = [0, 3], sizes = [8, 1], strides = [1, 1]} : vector<8x4xf32> to vector<8x1xf32>
      %134 = vector.broadcast %133 : vector<8x1xf32> to vector<8x8xf32>
      %135 = arith.mulf %132, %134 : vector<8x8xf32>
      %136 = tpu.concatenate %123, %127, %131, %135 in 1 : vector<8x8xf32>, vector<8x8xf32>, vector<8x8xf32>, vector<8x8xf32> -> vector<8x32xf32>
      %137 = arith.truncf %136 : vector<8x32xf32> to vector<8x32xbf16>
      %c0_42 = arith.constant 0 : index
      %c0_43 = arith.constant 0 : index
      %c0_44 = arith.constant 0 : index
      %138 = vector.load %arg7[%c0_42, %c0_43, %c0_44] : memref<1x8x32xbf16, #tpu.memory_space<vmem>>, vector<1x8x32xbf16>
      %139 = vector.shape_cast %138 : vector<1x8x32xbf16> to vector<8x32xbf16>
      %140 = vector.shape_cast %137 : vector<8x32xbf16> to vector<1x8x32xbf16>
      tpu.vector_store %arg7[%c0_42, %c0_43, %c0_44], %140 {strides = array<i32>} : memref<1x8x32xbf16, #tpu.memory_space<vmem>>, vector<1x8x32xbf16>,
    } else {
    }
    return
  }
  func.func @transform_0(%arg0: i32, %arg1: i32, %arg2: i32, %arg3: i32) -> (i32, i32, i32) {
    %c0_i32 = arith.constant 0 : i32
    return %arg0, %arg2, %arg1 : i32, i32, i32
  }
  func.func @transform_1(%arg0: i32, %arg1: i32, %arg2: i32, %arg3: i32) -> (i32, i32, i32) {
    %c0_i32 = arith.constant 0 : i32
    return %arg0, %arg3, %arg1 : i32, i32, i32
  }
  func.func @transform_2(%arg0: i32, %arg1: i32, %arg2: i32, %arg3: i32) -> (i32, i32, i32) {
    %c0_i32 = arith.constant 0 : i32
    return %arg0, %arg3, %arg1 : i32, i32, i32
  }
  func.func @transform_3(%arg0: i32, %arg1: i32, %arg2: i32, %arg3: i32) -> (i32, i32, i32) {
    %c0_i32 = arith.constant 0 : i32
    return %arg0, %arg2, %arg1 : i32, i32, i32
  }
}

module attributes {stable_mosaic.version = 11 : i64} {
  func.func @_qkv_proj_kernel(%arg0: i32, %arg1: i32, %arg2: memref<1x8x32xbf16, #tpu.memory_space<vmem>>, %arg3: memref<32x96xbf16, #tpu.memory_space<vmem>>, %arg4: memref<1x96xf32, #tpu.memory_space<vmem>>, %arg5: memref<1x8x32xbf16, #tpu.memory_space<vmem>>, %arg6: memref<1x8x32xbf16, #tpu.memory_space<vmem>>, %arg7: memref<1x8x32xbf16, #tpu.memory_space<vmem>>) attributes {dimension_semantics = [#tpu.dimension_semantics<parallel>, #tpu.dimension_semantics<parallel>], iteration_bounds = array<i64: 2, 1>, scalar_prefetch = 0 : i64, scratch_operands = 0 : i64, tpu.core_type = #tpu.core_type<tc>, window_params = [{transform_indices = @transform_0, window_bounds = array<i64: 1, 8, 32>}, {pipeline_mode = #tpu.pipeline_mode<synchronous>, transform_indices = @transform_1, window_bounds = array<i64: 32, 96>}, {pipeline_mode = #tpu.pipeline_mode<synchronous>, transform_indices = @transform_2, window_bounds = array<i64: 1, 96>}, {transform_indices = @transform_3, window_bounds = array<i64: 1, 8, 32>}, {transform_indices = @transform_4, window_bounds = array<i64: 1, 8, 32>}, {transform_indices = @transform_5, window_bounds = array<i64: 1, 8, 32>}]} {
    %c0 = arith.constant 0 : index
    %c0_0 = arith.constant 0 : index
    %c0_1 = arith.constant 0 : index
    %0 = vector.load %arg2[%c0, %c0_0, %c0_1] : memref<1x8x32xbf16, #tpu.memory_space<vmem>>, vector<1x8x32xbf16>
    %1 = vector.shape_cast %0 : vector<1x8x32xbf16> to vector<8x32xbf16>
    %c0_2 = arith.constant 0 : index
    %c0_3 = arith.constant 0 : index
    %2 = vector.load %arg3[%c0_2, %c0_3] : memref<32x96xbf16, #tpu.memory_space<vmem>>, vector<32x96xbf16>
    %cst = arith.constant dense<0.000000e+00> : vector<8x96xf32>
    %3 = tpu.matmul %1, %2, %cst {dimension_numbers = #tpu.dot_dimension_numbers<[1], [0], [0], [1], [0, 0, 1, 1], [], []>} : vector<8x32xbf16>, vector<32x96xbf16>, vector<8x96xf32> -> vector<8x96xf32>
    %c0_4 = arith.constant 0 : index
    %c0_5 = arith.constant 0 : index
    %4 = vector.load %arg4[%c0_4, %c0_5] : memref<1x96xf32, #tpu.memory_space<vmem>>, vector<1x96xf32>
    %5 = vector.broadcast %4 : vector<1x96xf32> to vector<8x96xf32>
    %6 = arith.addf %3, %5 : vector<8x96xf32>
    %7 = vector.extract_strided_slice %6 {offsets = [0, 0], sizes = [8, 32], strides = [1, 1]} : vector<8x96xf32> to vector<8x32xf32>
    %8 = arith.truncf %7 : vector<8x32xf32> to vector<8x32xbf16>
    %c0_6 = arith.constant 0 : index
    %c0_7 = arith.constant 0 : index
    %c0_8 = arith.constant 0 : index
    %9 = vector.load %arg5[%c0_6, %c0_7, %c0_8] : memref<1x8x32xbf16, #tpu.memory_space<vmem>>, vector<1x8x32xbf16>
    %10 = vector.shape_cast %9 : vector<1x8x32xbf16> to vector<8x32xbf16>
    %11 = vector.shape_cast %8 : vector<8x32xbf16> to vector<1x8x32xbf16>
    tpu.vector_store %arg5[%c0_6, %c0_7, %c0_8], %11 {strides = array<i32>} : memref<1x8x32xbf16, #tpu.memory_space<vmem>>, vector<1x8x32xbf16>,
    %12 = vector.extract_strided_slice %6 {offsets = [0, 32], sizes = [8, 32], strides = [1, 1]} : vector<8x96xf32> to vector<8x32xf32>
    %13 = arith.truncf %12 : vector<8x32xf32> to vector<8x32xbf16>
    %c0_9 = arith.constant 0 : index
    %c0_10 = arith.constant 0 : index
    %c0_11 = arith.constant 0 : index
    %14 = vector.load %arg6[%c0_9, %c0_10, %c0_11] : memref<1x8x32xbf16, #tpu.memory_space<vmem>>, vector<1x8x32xbf16>
    %15 = vector.shape_cast %14 : vector<1x8x32xbf16> to vector<8x32xbf16>
    %16 = vector.shape_cast %13 : vector<8x32xbf16> to vector<1x8x32xbf16>
    tpu.vector_store %arg6[%c0_9, %c0_10, %c0_11], %16 {strides = array<i32>} : memref<1x8x32xbf16, #tpu.memory_space<vmem>>, vector<1x8x32xbf16>,
    %17 = vector.extract_strided_slice %6 {offsets = [0, 64], sizes = [8, 32], strides = [1, 1]} : vector<8x96xf32> to vector<8x32xf32>
    %18 = arith.truncf %17 : vector<8x32xf32> to vector<8x32xbf16>
    %c0_12 = arith.constant 0 : index
    %c0_13 = arith.constant 0 : index
    %c0_14 = arith.constant 0 : index
    %19 = vector.load %arg7[%c0_12, %c0_13, %c0_14] : memref<1x8x32xbf16, #tpu.memory_space<vmem>>, vector<1x8x32xbf16>
    %20 = vector.shape_cast %19 : vector<1x8x32xbf16> to vector<8x32xbf16>
    %21 = vector.shape_cast %18 : vector<8x32xbf16> to vector<1x8x32xbf16>
    tpu.vector_store %arg7[%c0_12, %c0_13, %c0_14], %21 {strides = array<i32>} : memref<1x8x32xbf16, #tpu.memory_space<vmem>>, vector<1x8x32xbf16>,
    return
  }
  func.func @transform_0(%arg0: i32, %arg1: i32) -> (i32, i32, i32) {
    %c0_i32 = arith.constant 0 : i32
    %c0_i32_0 = arith.constant 0 : i32
    return %arg0, %arg1, %c0_i32 : i32, i32, i32
  }
  func.func @transform_1(%arg0: i32, %arg1: i32) -> (i32, i32) {
    %c0_i32 = arith.constant 0 : i32
    %c0_i32_0 = arith.constant 0 : i32
    %c0_i32_1 = arith.constant 0 : i32
    return %c0_i32, %c0_i32_0 : i32, i32
  }
  func.func @transform_2(%arg0: i32, %arg1: i32) -> (i32, i32) {
    %c0_i32 = arith.constant 0 : i32
    %c0_i32_0 = arith.constant 0 : i32
    %c0_i32_1 = arith.constant 0 : i32
    return %c0_i32, %c0_i32_0 : i32, i32
  }
  func.func @transform_3(%arg0: i32, %arg1: i32) -> (i32, i32, i32) {
    %c0_i32 = arith.constant 0 : i32
    %c0_i32_0 = arith.constant 0 : i32
    return %arg0, %arg1, %c0_i32 : i32, i32, i32
  }
  func.func @transform_4(%arg0: i32, %arg1: i32) -> (i32, i32, i32) {
    %c0_i32 = arith.constant 0 : i32
    %c0_i32_0 = arith.constant 0 : i32
    return %arg0, %arg1, %c0_i32 : i32, i32, i32
  }
  func.func @transform_5(%arg0: i32, %arg1: i32) -> (i32, i32, i32) {
    %c0_i32 = arith.constant 0 : i32
    %c0_i32_0 = arith.constant 0 : i32
    return %arg0, %arg1, %c0_i32 : i32, i32, i32
  }
}

module attributes {stable_mosaic.version = 11 : i64} {
  func.func @_out_proj_kernel(%arg0: i32, %arg1: i32, %arg2: memref<1x8x32xbf16, #tpu.memory_space<vmem>>, %arg3: memref<32x32xbf16, #tpu.memory_space<vmem>>, %arg4: memref<1x32xf32, #tpu.memory_space<vmem>>, %arg5: memref<1x8x32xf32, #tpu.memory_space<vmem>>) attributes {dimension_semantics = [#tpu.dimension_semantics<parallel>, #tpu.dimension_semantics<parallel>], iteration_bounds = array<i64: 2, 1>, scalar_prefetch = 0 : i64, scratch_operands = 0 : i64, tpu.core_type = #tpu.core_type<tc>, window_params = [{transform_indices = @transform_0, window_bounds = array<i64: 1, 8, 32>}, {pipeline_mode = #tpu.pipeline_mode<synchronous>, transform_indices = @transform_1, window_bounds = array<i64: 32, 32>}, {pipeline_mode = #tpu.pipeline_mode<synchronous>, transform_indices = @transform_2, window_bounds = array<i64: 1, 32>}, {transform_indices = @transform_3, window_bounds = array<i64: 1, 8, 32>}]} {
    %c0 = arith.constant 0 : index
    %c0_0 = arith.constant 0 : index
    %c0_1 = arith.constant 0 : index
    %0 = vector.load %arg2[%c0, %c0_0, %c0_1] : memref<1x8x32xbf16, #tpu.memory_space<vmem>>, vector<1x8x32xbf16>
    %1 = vector.shape_cast %0 : vector<1x8x32xbf16> to vector<8x32xbf16>
    %c0_2 = arith.constant 0 : index
    %c0_3 = arith.constant 0 : index
    %2 = vector.load %arg3[%c0_2, %c0_3] : memref<32x32xbf16, #tpu.memory_space<vmem>>, vector<32x32xbf16>
    %cst = arith.constant dense<0.000000e+00> : vector<8x32xf32>
    %3 = tpu.matmul %1, %2, %cst {dimension_numbers = #tpu.dot_dimension_numbers<[1], [0], [0], [1], [0, 0, 1, 1], [], []>} : vector<8x32xbf16>, vector<32x32xbf16>, vector<8x32xf32> -> vector<8x32xf32>
    %c0_4 = arith.constant 0 : index
    %c0_5 = arith.constant 0 : index
    %4 = vector.load %arg4[%c0_4, %c0_5] : memref<1x32xf32, #tpu.memory_space<vmem>>, vector<1x32xf32>
    %5 = vector.broadcast %4 : vector<1x32xf32> to vector<8x32xf32>
    %6 = arith.addf %3, %5 : vector<8x32xf32>
    %c0_6 = arith.constant 0 : index
    %c0_7 = arith.constant 0 : index
    %c0_8 = arith.constant 0 : index
    %7 = vector.load %arg5[%c0_6, %c0_7, %c0_8] : memref<1x8x32xf32, #tpu.memory_space<vmem>>, vector<1x8x32xf32>
    %8 = vector.shape_cast %7 : vector<1x8x32xf32> to vector<8x32xf32>
    %9 = vector.shape_cast %6 : vector<8x32xf32> to vector<1x8x32xf32>
    tpu.vector_store %arg5[%c0_6, %c0_7, %c0_8], %9 {strides = array<i32>} : memref<1x8x32xf32, #tpu.memory_space<vmem>>, vector<1x8x32xf32>,
    return
  }
  func.func @transform_0(%arg0: i32, %arg1: i32) -> (i32, i32, i32) {
    %c0_i32 = arith.constant 0 : i32
    %c0_i32_0 = arith.constant 0 : i32
    return %arg0, %arg1, %c0_i32 : i32, i32, i32
  }
  func.func @transform_1(%arg0: i32, %arg1: i32) -> (i32, i32) {
    %c0_i32 = arith.constant 0 : i32
    %c0_i32_0 = arith.constant 0 : i32
    %c0_i32_1 = arith.constant 0 : i32
    return %c0_i32, %c0_i32_0 : i32, i32
  }
  func.func @transform_2(%arg0: i32, %arg1: i32) -> (i32, i32) {
    %c0_i32 = arith.constant 0 : i32
    %c0_i32_0 = arith.constant 0 : i32
    %c0_i32_1 = arith.constant 0 : i32
    return %c0_i32, %c0_i32_0 : i32, i32
  }
  func.func @transform_3(%arg0: i32, %arg1: i32) -> (i32, i32, i32) {
    %c0_i32 = arith.constant 0 : i32
    %c0_i32_0 = arith.constant 0 : i32
    return %arg0, %arg1, %c0_i32 : i32, i32, i32
  }
}

</mosaic_0001>

<llo_original>
// kernel: multi_head_self_attention.3
$region0: #{multi_head_self_attention.3}
  #allocation0 [shape = 'u32[]', space=smem, size = 0x4, offset = 0x4, fixed_abs, tag = 'smem constant byte address 0x4 - core index']
  #allocation1 [shape = 'u32[72,128]{1,0:T(1,128)}', space=vmem, size = 0x9000, scoped, tag = 'internal scratch']
  %s0 = inlined_call_operand.vmem [shape: bf16[2,8,32], index: 0, kind: input, shape index: {}]
  %s1 = inlined_call_operand.vmem [shape: bf16[32,96], index: 1, kind: input, shape index: {}]
  %s2 = inlined_call_operand.vmem [shape: f32[1,96], index: 2, kind: input, shape index: {}]
  %s3 = inlined_call_operand.vmem [shape: bf16[2,8,32], index: 3, kind: output, shape index: {0}]
  %s4 = inlined_call_operand.vmem [shape: bf16[2,8,32], index: 4, kind: output, shape index: {1}]
  %s5 = inlined_call_operand.vmem [shape: bf16[2,8,32], index: 5, kind: output, shape index: {2}]
  %6 = xla_tuple %s3, %s4, %s5
  %s7 = sld [smem:[#allocation0]]
  $region61: #{multi_head_self_attention.3} parent=0
    _
  %s9 = ssub.s32 1, %s7
  %s10 = scalar_select 0, %s9, %s7
  loop: start=0, step=1, limit=4
  $region2: #{multi_head_self_attention.3} parent=0 // loop_pre_header
    _
  $region3: #{multi_head_self_attention.3} parent=0 // loop_header
    %s12 = sphi 0, %s16
    %p13 = scmp.ge.s32.totalorder %s12, 4
    %s19 = sphi 0, %s31
    %s20 = sphi 0, %s27
    %s21 = sphi 0, %s19
    %s22 = sphi 0, %s20
    %s23 = sphi 0, %s21
    %s24 = sphi 0, %s22
    %s36 = sphi 0, %s38
    %s39 = sphi 0, %s36
    %s40 = sphi 0, %s39
    %s56 = sphi 0, %s40
    %s60 = sphi 0, %s60
    %s62 = sphi 0, %s60
    %s63 = sphi 0, %s62
    %s77 = sphi 0, %s63
    %s81 = sphi 0, %s81
    %s83 = sphi 0, %s81
    %s84 = sphi 0, %s83
    %s98 = sphi 0, %s84
    %s106 = sphi 0, %s108
    %s109 = sphi 0, %s106
    %s110 = sphi 0, %s109
    %s126 = sphi 0, %s110
    %s134 = sphi 0, %s136
    %s137 = sphi 0, %s134
    %s138 = sphi 0, %s137
    %s154 = sphi 0, %s138
    %s162 = sphi 0, %s164
    %s165 = sphi 0, %s162
    %s166 = sphi 0, %s165
    %s182 = sphi 0, %s166
  $region4: #{multi_head_self_attention.3} parent=0 // loop_header_branch
    %15 = sbr.rel (%p13) target = $region8
  $region5: #{multi_head_self_attention.3} parent=0 // loop_body
    %s17 = ssub.s32 %s12, 1
    %s18 = ssub.s32 %s12, 2
    %s25 = sadd.s32 1, %s20
    %p26 = scmp.ge.s32.totalorder %s25, 1
    %s27 = scalar_select %p26, 0, %s25
    %s28 = sadd.s32 1, %s19
    %s29 = scalar_select %p26, %s28, %s19
    %p30 = scmp.ge.s32.totalorder %s29, 2
    %s31 = scalar_select %p30, 0, %s29
    %s32 = ssub.s32 %s19, %s31
    %s33 = ssub.s32 %s20, %s27
    %s34 = sor.u32 %s32, %s33
    %p35 = scmp.eq.s32.totalorder %s34, 0
    %s37 = sadd.s32 %s36, 1
    %s38 = scalar_select %p35, %s36, %s37
    %p41 = pneg %p35
    %p42 = scmp.eq.s32.totalorder %s12, 1
    %p43 = por %p41, %p42
    %p44 = scmp.ne.s32.totalorder %s36, %s39
    %p45 = scmp.eq.s32.totalorder %s12, 0
    %p46 = por %p44, %p45
    %p47 = scmp.ne.s32.totalorder %s36, %s39
    %p48 = scmp.eq.s32.totalorder %s17, 1
    %p49 = por %p47, %p48
    %p50 = scmp.ne.s32.totalorder %s39, %s40
    %p51 = scmp.eq.s32.totalorder %s17, 0
    %p52 = por %p50, %p51
    %p53 = scmp.ne.s32.totalorder %s39, %s40
    %p54 = scmp.eq.s32.totalorder %s18, 1
    %p55 = por %p53, %p54
    %p57 = scmp.ne.s32.totalorder %s40, %s56
    %p58 = scmp.eq.s32.totalorder %s18, 0
    %p59 = por %p57, %p58
    %s61 = sadd.s32 %s60, 1
    %p64 = scmp.eq.s32.totalorder %s12, 1
    %p65 = scmp.ne.s32.totalorder %s60, %s62
    %p66 = scmp.eq.s32.totalorder %s12, 0
    %p67 = por %p65, %p66
    %p68 = scmp.ne.s32.totalorder %s60, %s62
    %p69 = scmp.eq.s32.totalorder %s17, 1
    %p70 = por %p68, %p69
    %p71 = scmp.ne.s32.totalorder %s62, %s63
    %p72 = scmp.eq.s32.totalorder %s17, 0
    %p73 = por %p71, %p72
    %p74 = scmp.ne.s32.totalorder %s62, %s63
    %p75 = scmp.eq.s32.totalorder %s18, 1
    %p76 = por %p74, %p75
    %p78 = scmp.ne.s32.totalorder %s63, %s77
    %p79 = scmp.eq.s32.totalorder %s18, 0
    %p80 = por %p78, %p79
    %s82 = sadd.s32 %s81, 1
    %p85 = scmp.eq.s32.totalorder %s12, 1
    %p86 = scmp.ne.s32.totalorder %s81, %s83
    %p87 = scmp.eq.s32.totalorder %s12, 0
    %p88 = por %p86, %p87
    %p89 = scmp.ne.s32.totalorder %s81, %s83
    %p90 = scmp.eq.s32.totalorder %s17, 1
    %p91 = por %p89, %p90
    %p92 = scmp.ne.s32.totalorder %s83, %s84
    %p93 = scmp.eq.s32.totalorder %s17, 0
    %p94 = por %p92, %p93
    %p95 = scmp.ne.s32.totalorder %s83, %s84
    %p96 = scmp.eq.s32.totalorder %s18, 1
    %p97 = por %p95, %p96
    %p99 = scmp.ne.s32.totalorder %s84, %s98
    %p100 = scmp.eq.s32.totalorder %s18, 0
    %p101 = por %p99, %p100
    %s102 = ssub.s32 %s19, %s31
    %s103 = ssub.s32 %s20, %s27
    %s104 = sor.u32 %s102, %s103
    %p105 = scmp.eq.s32.totalorder %s104, 0
    %s107 = sadd.s32 %s106, 1
    %s108 = scalar_select %p105, %s106, %s107
    %p111 = pneg %p105
    %p112 = scmp.eq.s32.totalorder %s12, 1
    %p113 = por %p111, %p112
    %p114 = scmp.ne.s32.totalorder %s106, %s109
    %p115 = scmp.eq.s32.totalorder %s12, 0
    %p116 = por %p114, %p115
    %p117 = scmp.ne.s32.totalorder %s106, %s109
    %p118 = scmp.eq.s32.totalorder %s17, 1
    %p119 = por %p117, %p118
    %p120 = scmp.ne.s32.totalorder %s109, %s110
    %p121 = scmp.eq.s32.totalorder %s17, 0
    %p122 = por %p120, %p121
    %p123 = scmp.ne.s32.totalorder %s109, %s110
    %p124 = scmp.eq.s32.totalorder %s18, 1
    %p125 = por %p123, %p124
    %p127 = scmp.ne.s32.totalorder %s110, %s126
    %p128 = scmp.eq.s32.totalorder %s18, 0
    %p129 = por %p127, %p128
    %s130 = ssub.s32 %s19, %s31
    %s131 = ssub.s32 %s20, %s27
    %s132 = sor.u32 %s130, %s131
    %p133 = scmp.eq.s32.totalorder %s132, 0
    %s135 = sadd.s32 %s134, 1
    %s136 = scalar_select %p133, %s134, %s135
    %p139 = pneg %p133
    %p140 = scmp.eq.s32.totalorder %s12, 1
    %p141 = por %p139, %p140
    %p142 = scmp.ne.s32.totalorder %s134, %s137
    %p143 = scmp.eq.s32.totalorder %s12, 0
    %p144 = por %p142, %p143
    %p145 = scmp.ne.s32.totalorder %s134, %s137
    %p146 = scmp.eq.s32.totalorder %s17, 1
    %p147 = por %p145, %p146
    %p148 = scmp.ne.s32.totalorder %s137, %s138
    %p149 = scmp.eq.s32.totalorder %s17, 0
    %p150 = por %p148, %p149
    %p151 = scmp.ne.s32.totalorder %s137, %s138
    %p152 = scmp.eq.s32.totalorder %s18, 1
    %p153 = por %p151, %p152
    %p155 = scmp.ne.s32.totalorder %s138, %s154
    %p156 = scmp.eq.s32.totalorder %s18, 0
    %p157 = por %p155, %p156
    %s158 = ssub.s32 %s19, %s31
    %s159 = ssub.s32 %s20, %s27
    %s160 = sor.u32 %s158, %s159
    %p161 = scmp.eq.s32.totalorder %s160, 0
    %s163 = sadd.s32 %s162, 1
    %s164 = scalar_select %p161, %s162, %s163
    %p167 = pneg %p161
    %p168 = scmp.eq.s32.totalorder %s12, 1
    %p169 = por %p167, %p168
    %p170 = scmp.ne.s32.totalorder %s162, %s165
    %p171 = scmp.eq.s32.totalorder %s12, 0
    %p172 = por %p170, %p171
    %p173 = scmp.ne.s32.totalorder %s162, %s165
    %p174 = scmp.eq.s32.totalorder %s17, 1
    %p175 = por %p173, %p174
    %p176 = scmp.ne.s32.totalorder %s165, %s166
    %p177 = scmp.eq.s32.totalorder %s17, 0
    %p178 = por %p176, %p177
    %p179 = scmp.ne.s32.totalorder %s165, %s166
    %p180 = scmp.eq.s32.totalorder %s18, 1
    %p181 = por %p179, %p180
    %p183 = scmp.ne.s32.totalorder %s166, %s182
    %p184 = scmp.eq.s32.totalorder %s18, 0
    %p185 = por %p183, %p184
    %p186 = scmp.le.s32.totalorder 1, %s12
    %p187 = scmp.lt.s32.totalorder %s12, 3
    %p188 = pnand %p186, %p187
    %p189 = pneg %p188
    // Predicated region
    $region9: #{multi_head_self_attention.3} parent=5 // pred_check
      _
    $region10: #{multi_head_self_attention.3} parent=5 // pred_check_branch
      %191 = sbr.rel (%p188) target = $region12
    $region11: #{multi_head_self_attention.3} parent=5 // pred_region
      %s192 = ssub.s32 %s12, 1
      // Predicated region
      $region13: #{multi_head_self_attention.3} parent=11 // pred_check
        %p193 = pneg %p73
      $region14: #{multi_head_self_attention.3} parent=11 // pred_check_branch
        %195 = sbr.rel (%p193) target = $region16
      $region15: #{multi_head_self_attention.3} parent=11 // pred_region
        _
      $region16: #{multi_head_self_attention.3} parent=11 // pred_fallthru
        _
      // Predicated region
      $region17: #{multi_head_self_attention.3} parent=11 // pred_check
        %p196 = pneg %p94
      $region18: #{multi_head_self_attention.3} parent=11 // pred_check_branch
        %198 = sbr.rel (%p196) target = $region20
      $region19: #{multi_head_self_attention.3} parent=11 // pred_region
        _
      $region20: #{multi_head_self_attention.3} parent=11 // pred_fallthru
        _
    $region12: #{multi_head_self_attention.3} parent=5 // pred_fallthru
      _
    %p199 = scmp.lt.s32.totalorder %s12, 2
    // Predicated region
    $region21: #{multi_head_self_attention.3} parent=5 // pred_check
      %p200 = pneg %p199
    $region22: #{multi_head_self_attention.3} parent=5 // pred_check_branch
      %202 = sbr.rel (%p200) target = $region24
    $region23: #{multi_head_self_attention.3} parent=5 // pred_region
      // Predicated region
      $region25: #{multi_head_self_attention.3} parent=23 // pred_check
        %p203 = pneg %p46
      $region26: #{multi_head_self_attention.3} parent=23 // pred_check_branch
        %205 = sbr.rel (%p203) target = $region28
      $region27: #{multi_head_self_attention.3} parent=23 // pred_region
        %p206 = scmp.lt.s32.totalorder %s19, 1
        %s207 = scalar_select %p206, %s19, 1
        %p208 = scmp.lt.s32.totalorder %s20, 0
        %s209 = scalar_select %p208, %s20, 0
        %s210 = sadd.s32 %s209, %s207
        %s211 = smul.addr %s210, 4
        %s212 = scalar_lea.vmem %s0, %s211
      $region28: #{multi_head_self_attention.3} parent=23 // pred_fallthru
        _
    $region24: #{multi_head_self_attention.3} parent=5 // pred_fallthru
      _
    %p213 = scmp.le.s32.totalorder 1, %s12
    %p214 = scmp.lt.s32.totalorder %s12, 3
    %p215 = pnand %p213, %p214
    %p216 = pneg %p215
    // Predicated region
    $region29: #{multi_head_self_attention.3} parent=5 // pred_check
      _
    $region30: #{multi_head_self_attention.3} parent=5 // pred_check_branch
      %218 = sbr.rel (%p215) target = $region32
    $region31: #{multi_head_self_attention.3} parent=5 // pred_region
      %s219 = ssub.s32 %s12, 1
      %p220 = scmp.lt.s32.totalorder %s21, 1
      %s221 = scalar_select %p220, %s21, 1
      %p222 = scmp.lt.s32.totalorder %s22, 0
      %s223 = scalar_select %p222, %s22, 0
      %s224 = sadd.s32 %s223, %s221
      %s225 = smul.addr %s224, 4
      %s226 = scalar_lea.vmem %s0, %s225
      %p227 = pneg %p52
      %p228 = pneg %p49
      %p229 = pneg %p73
      %p230 = pneg %p70
      %p231 = pneg %p94
      %p232 = pneg %p91
      %p233 = pneg %p122
      %p234 = pneg %p119
      %p235 = scmp.lt.s32.totalorder %s21, 1
      %s236 = scalar_select %p235, %s21, 1
      %p237 = scmp.lt.s32.totalorder %s22, 0
      %s238 = scalar_select %p237, %s22, 0
      %s239 = sadd.s32 %s238, %s236
      %s240 = smul.addr %s239, 4
      %s241 = scalar_lea.vmem %s3, %s240
      %p242 = pneg %p150
      %p243 = pneg %p147
      %p244 = scmp.lt.s32.totalorder %s21, 1
      %s245 = scalar_select %p244, %s21, 1
      %p246 = scmp.lt.s32.totalorder %s22, 0
      %s247 = scalar_select %p246, %s22, 0
      %s248 = sadd.s32 %s247, %s245
      %s249 = smul.addr %s248, 4
      %s250 = scalar_lea.vmem %s4, %s249
      %p251 = pneg %p178
      %p252 = pneg %p175
      %p253 = scmp.lt.s32.totalorder %s21, 1
      %s254 = scalar_select %p253, %s21, 1
      %p255 = scmp.lt.s32.totalorder %s22, 0
      %s256 = scalar_select %p255, %s22, 0
      %s257 = sadd.s32 %s256, %s254
      %s258 = smul.addr %s257, 4
      %s259 = scalar_lea.vmem %s5, %s258
      %p260 = scmp.lt.s32.totalorder %s21, 1
      %s261 = scalar_select %p260, %s21, 1
      %p262 = scmp.lt.s32.totalorder %s22, 0
      %s263 = scalar_select %p262, %s22, 0
      %s264 = sadd.s32 %s263, %s261
      %s265 = smul.addr %s264, 4
      %s266 = scalar_lea.vmem %s0, %s265
      %p267 = scmp.lt.s32.totalorder %s21, 1
      %s268 = scalar_select %p267, %s21, 1
      %p269 = scmp.lt.s32.totalorder %s22, 0
      %s270 = scalar_select %p269, %s22, 0
      %s271 = sadd.s32 %s270, %s268
      %s272 = smul.addr %s271, 4
      %s273 = scalar_lea.vmem %s3, %s272
      %p274 = scmp.lt.s32.totalorder %s21, 1
      %s275 = scalar_select %p274, %s21, 1
      %p276 = scmp.lt.s32.totalorder %s22, 0
      %s277 = scalar_select %p276, %s22, 0
      %s278 = sadd.s32 %s277, %s275
      %s279 = smul.addr %s278, 4
      %s280 = scalar_lea.vmem %s4, %s279
      %p281 = scmp.lt.s32.totalorder %s21, 1
      %s282 = scalar_select %p281, %s21, 1
      %p283 = scmp.lt.s32.totalorder %s22, 0
      %s284 = scalar_select %p283, %s22, 0
      %s285 = sadd.s32 %s284, %s282
      %s286 = smul.addr %s285, 4
      %s287 = scalar_lea.vmem %s5, %s286
      %v289 = vld [vmem:[%s266] sm:$0xf]
      %v290 = vld [vmem:[%s1] sm:$0xf]
      %v291 = vld [vmem:[%s1 + $0x4] sm:$0xf]
      %v292 = vld [vmem:[%s1 + $0x8] sm:$0xf]
      %v293 = vld [vmem:[%s1 + $0xc] sm:$0xf]
      %v294 = vld [vmem:[%s2] sm:$0x1]
      %v296 = vperm.slane %v294, 0
      %v302 = vunpack.c.l.b16 %v290
      %v303 = vunpack.c.l.b16 %v291
      %v304 = vunpack.c.l.b16 %v292
      %v305 = vunpack.c.l.b16 %v293
      %v306 = vpack.c.b16 %v303, %v302
      %v307 = vpack.c.b16 %v305, %v304
      %vm310 = vcmask 261120
      %v312 = vsel %vm310, %v289, 0
      %314 = vmatpush.bf16.msra.mxu0 0
      %315 = vmatpush.bf16.msra.mxu0 0
      %316 = vmatpush.bf16.msra.mxu0 0
      %317 = vmatpush.bf16.msra.mxu0 0
      %318 = vmatpush.bf16.msra.mxu0 0
      %319 = vmatpush.bf16.msra.mxu0 0
      %320 = vmatpush.bf16.msra.mxu0 %v307
      %321 = vmatpush.bf16.msra.mxu0 %v306
      %322 = vmatmul.bf16.gmra.mxu0 %v312
      %v323 = vpop.f32.mrf.mxu0
      %v324 = vadd.f32 %v296, %v323
      %v325 = vpop.f32.mrf.mxu0
      %326 = vdwg.mxu0
      %v327 = vpack.c.bf16 %v324, %v324
      %vm328 = vcmask 257024
      %329 = vst.msk [vmem:[%s273] sm:$0xf] %vm328, %v327
      %331 = vrot.lane.b32.xlu0 %v327, 96
      %v332 = vpop.permute.xlu0 %331
      %334 = vst.msk [vmem:[%s280] sm:$0xf] %vm328, %v332
      %335 = vrot.lane.b32.xlu0 %v327, 64
      %v336 = vpop.permute.xlu0 %335
      %338 = vst.msk [vmem:[%s287] sm:$0xf] %vm328, %v336
      %p339 = scmp.lt.s32.totalorder %s21, 1
      %s340 = scalar_select %p339, %s21, 1
      %p341 = scmp.lt.s32.totalorder %s22, 0
      %s342 = scalar_select %p341, %s22, 0
      %s343 = sadd.s32 %s342, %s340
      %s344 = smul.addr %s343, 4
      %s345 = scalar_lea.vmem %s3, %s344
      %p346 = scmp.lt.s32.totalorder %s21, 1
      %s347 = scalar_select %p346, %s21, 1
      %p348 = scmp.lt.s32.totalorder %s22, 0
      %s349 = scalar_select %p348, %s22, 0
      %s350 = sadd.s32 %s349, %s347
      %s351 = smul.addr %s350, 4
      %s352 = scalar_lea.vmem %s4, %s351
      %p353 = scmp.lt.s32.totalorder %s21, 1
      %s354 = scalar_select %p353, %s21, 1
      %p355 = scmp.lt.s32.totalorder %s22, 0
      %s356 = scalar_select %p355, %s22, 0
      %s357 = sadd.s32 %s356, %s354
      %s358 = smul.addr %s357, 4
      %s359 = scalar_lea.vmem %s5, %s358
      // Predicated region
      $region33: #{multi_head_self_attention.3} parent=31 // pred_check
        %p360 = pneg %p119
      $region34: #{multi_head_self_attention.3} parent=31 // pred_check_branch
        %362 = sbr.rel (%p360) target = $region36
      $region35: #{multi_head_self_attention.3} parent=31 // pred_region
        _
      $region36: #{multi_head_self_attention.3} parent=31 // pred_fallthru
        _
      // Predicated region
      $region37: #{multi_head_self_attention.3} parent=31 // pred_check
        %p363 = pneg %p147
      $region38: #{multi_head_self_attention.3} parent=31 // pred_check_branch
        %365 = sbr.rel (%p363) target = $region40
      $region39: #{multi_head_self_attention.3} parent=31 // pred_region
        _
      $region40: #{multi_head_self_attention.3} parent=31 // pred_fallthru
        _
      // Predicated region
      $region41: #{multi_head_self_attention.3} parent=31 // pred_check
        %p366 = pneg %p175
      $region42: #{multi_head_self_attention.3} parent=31 // pred_check_branch
        %368 = sbr.rel (%p366) target = $region44
      $region43: #{multi_head_self_attention.3} parent=31 // pred_region
        _
      $region44: #{multi_head_self_attention.3} parent=31 // pred_fallthru
        _
    $region32: #{multi_head_self_attention.3} parent=5 // pred_fallthru
      _
    %p369 = scmp.le.s32.totalorder 2, %s12
    // Predicated region
    $region45: #{multi_head_self_attention.3} parent=5 // pred_check
      %p370 = pneg %p369
    $region46: #{multi_head_self_attention.3} parent=5 // pred_check_branch
      %372 = sbr.rel (%p370) target = $region48
    $region47: #{multi_head_self_attention.3} parent=5 // pred_region
      %s373 = ssub.s32 %s12, 2
      // Predicated region
      $region49: #{multi_head_self_attention.3} parent=47 // pred_check
        %p374 = pneg %p125
      $region50: #{multi_head_self_attention.3} parent=47 // pred_check_branch
        %376 = sbr.rel (%p374) target = $region52
      $region51: #{multi_head_self_attention.3} parent=47 // pred_region
        %p377 = scmp.lt.s32.totalorder %s23, 1
        %s378 = scalar_select %p377, %s23, 1
        %p379 = scmp.lt.s32.totalorder %s24, 0
        %s380 = scalar_select %p379, %s24, 0
        %s381 = sadd.s32 %s380, %s378
        %s382 = smul.addr %s381, 4
        %s383 = scalar_lea.vmem %s3, %s382
      $region52: #{multi_head_self_attention.3} parent=47 // pred_fallthru
        _
      // Predicated region
      $region53: #{multi_head_self_attention.3} parent=47 // pred_check
        %p384 = pneg %p153
      $region54: #{multi_head_self_attention.3} parent=47 // pred_check_branch
        %386 = sbr.rel (%p384) target = $region56
      $region55: #{multi_head_self_attention.3} parent=47 // pred_region
        %p387 = scmp.lt.s32.totalorder %s23, 1
        %s388 = scalar_select %p387, %s23, 1
        %p389 = scmp.lt.s32.totalorder %s24, 0
        %s390 = scalar_select %p389, %s24, 0
        %s391 = sadd.s32 %s390, %s388
        %s392 = smul.addr %s391, 4
        %s393 = scalar_lea.vmem %s4, %s392
      $region56: #{multi_head_self_attention.3} parent=47 // pred_fallthru
        _
      // Predicated region
      $region57: #{multi_head_self_attention.3} parent=47 // pred_check
        %p394 = pneg %p181
      $region58: #{multi_head_self_attention.3} parent=47 // pred_check_branch
        %396 = sbr.rel (%p394) target = $region60
      $region59: #{multi_head_self_attention.3} parent=47 // pred_region
        %p397 = scmp.lt.s32.totalorder %s23, 1
        %s398 = scalar_select %p397, %s23, 1
        %p399 = scmp.lt.s32.totalorder %s24, 0
        %s400 = scalar_select %p399, %s24, 0
        %s401 = sadd.s32 %s400, %s398
        %s402 = smul.addr %s401, 4
        %s403 = scalar_lea.vmem %s5, %s402
      $region60: #{multi_head_self_attention.3} parent=47 // pred_fallthru
        _
    $region48: #{multi_head_self_attention.3} parent=5 // pred_fallthru
      _
  $region6: #{multi_head_self_attention.3} parent=0 // loop_footer
    %s16 = sadd.s32 1, %s12
  $region7: #{multi_head_self_attention.3} parent=0 // loop_footer_branch
    %11 = sbr.rel target = $region3
  $region8: #{multi_head_self_attention.3} parent=0 // loop_exit
    _

// kernel: multi_head_self_attention.5
$region0: #{multi_head_self_attention.5}
  #allocation0 [shape = 'u32[]', space=smem, size = 0x4, offset = 0x4, fixed_abs, tag = 'smem constant byte address 0x4 - core index']
  #allocation1 [shape = 'u32[72,128]{1,0:T(1,128)}', space=vmem, size = 0x9000, scoped, tag = 'internal scratch']
  %s0 = inlined_call_operand.vmem [shape: bf16[2,8,32], index: 0, kind: input, shape index: {}]
  %s1 = inlined_call_operand.vmem [shape: bf16[32,32], index: 1, kind: input, shape index: {}]
  %s2 = inlined_call_operand.vmem [shape: f32[1,32], index: 2, kind: input, shape index: {}]
  %s3 = inlined_call_operand.hbm [shape: f32[2,8,32], index: 3, kind: output, shape index: {}]
  %s4 = sld [smem:[#allocation0]]
  $region45: #{multi_head_self_attention.5} parent=0
    _
  %s6 = ssub.s32 1, %s4
  %s7 = scalar_select 0, %s6, %s4
  $region1: #{multi_head_self_attention.5} parent=0
    #allocation2 [shape = 'u8[8192]{0}', space=vmem, size = 0x2000, scoped, tag = 'output window, operand 0']
    #allocation3 [shape = 's32[2]{0}', space=sflag, size = 0x8, scoped, tag = 'scoped memory for multi_head_self_attention.5']
    %8 = vsyncpa [#allocation3], 0
    %s9 = scalar_lea.sflag [#allocation3], 1
    %10 = vsyncpa %s9, 0
    loop: start=0, step=1, limit=4
    $region2: #{multi_head_self_attention.5} parent=1 // loop_pre_header
      _
    $region3: #{multi_head_self_attention.5} parent=1 // loop_header
      %s12 = sphi 0, %s16
      %p13 = scmp.ge.s32.totalorder %s12, 4
      %s19 = sphi 0, %s31
      %s20 = sphi 0, %s27
      %s21 = sphi 0, %s19
      %s22 = sphi 0, %s20
      %s23 = sphi 0, %s21
      %s24 = sphi 0, %s22
      %s36 = sphi 0, %s38
      %s39 = sphi 0, %s36
      %s40 = sphi 0, %s39
      %s56 = sphi 0, %s40
      %s60 = sphi 0, %s60
      %s62 = sphi 0, %s60
      %s63 = sphi 0, %s62
      %s77 = sphi 0, %s63
      %s81 = sphi 0, %s81
      %s83 = sphi 0, %s81
      %s84 = sphi 0, %s83
      %s98 = sphi 0, %s84
      %s106 = sphi 0, %s108
      %s109 = sphi 0, %s106
      %s110 = sphi 0, %s109
      %s126 = sphi 0, %s110
    $region4: #{multi_head_self_attention.5} parent=1 // loop_header_branch
      %15 = sbr.rel (%p13) target = $region8
    $region5: #{multi_head_self_attention.5} parent=1 // loop_body
      %s17 = ssub.s32 %s12, 1
      %s18 = ssub.s32 %s12, 2
      %s25 = sadd.s32 1, %s20
      %p26 = scmp.ge.s32.totalorder %s25, 1
      %s27 = scalar_select %p26, 0, %s25
      %s28 = sadd.s32 1, %s19
      %s29 = scalar_select %p26, %s28, %s19
      %p30 = scmp.ge.s32.totalorder %s29, 2
      %s31 = scalar_select %p30, 0, %s29
      %s32 = ssub.s32 %s19, %s31
      %s33 = ssub.s32 %s20, %s27
      %s34 = sor.u32 %s32, %s33
      %p35 = scmp.eq.s32.totalorder %s34, 0
      %s37 = sadd.s32 %s36, 1
      %s38 = scalar_select %p35, %s36, %s37
      %p41 = pneg %p35
      %p42 = scmp.eq.s32.totalorder %s12, 1
      %p43 = por %p41, %p42
      %p44 = scmp.ne.s32.totalorder %s36, %s39
      %p45 = scmp.eq.s32.totalorder %s12, 0
      %p46 = por %p44, %p45
      %p47 = scmp.ne.s32.totalorder %s36, %s39
      %p48 = scmp.eq.s32.totalorder %s17, 1
      %p49 = por %p47, %p48
      %p50 = scmp.ne.s32.totalorder %s39, %s40
      %p51 = scmp.eq.s32.totalorder %s17, 0
      %p52 = por %p50, %p51
      %p53 = scmp.ne.s32.totalorder %s39, %s40
      %p54 = scmp.eq.s32.totalorder %s18, 1
      %p55 = por %p53, %p54
      %p57 = scmp.ne.s32.totalorder %s40, %s56
      %p58 = scmp.eq.s32.totalorder %s18, 0
      %p59 = por %p57, %p58
      %s61 = sadd.s32 %s60, 1
      %p64 = scmp.eq.s32.totalorder %s12, 1
      %p65 = scmp.ne.s32.totalorder %s60, %s62
      %p66 = scmp.eq.s32.totalorder %s12, 0
      %p67 = por %p65, %p66
      %p68 = scmp.ne.s32.totalorder %s60, %s62
      %p69 = scmp.eq.s32.totalorder %s17, 1
      %p70 = por %p68, %p69
      %p71 = scmp.ne.s32.totalorder %s62, %s63
      %p72 = scmp.eq.s32.totalorder %s17, 0
      %p73 = por %p71, %p72
      %p74 = scmp.ne.s32.totalorder %s62, %s63
      %p75 = scmp.eq.s32.totalorder %s18, 1
      %p76 = por %p74, %p75
      %p78 = scmp.ne.s32.totalorder %s63, %s77
      %p79 = scmp.eq.s32.totalorder %s18, 0
      %p80 = por %p78, %p79
      %s82 = sadd.s32 %s81, 1
      %p85 = scmp.eq.s32.totalorder %s12, 1
      %p86 = scmp.ne.s32.totalorder %s81, %s83
      %p87 = scmp.eq.s32.totalorder %s12, 0
      %p88 = por %p86, %p87
      %p89 = scmp.ne.s32.totalorder %s81, %s83
      %p90 = scmp.eq.s32.totalorder %s17, 1
      %p91 = por %p89, %p90
      %p92 = scmp.ne.s32.totalorder %s83, %s84
      %p93 = scmp.eq.s32.totalorder %s17, 0
      %p94 = por %p92, %p93
      %p95 = scmp.ne.s32.totalorder %s83, %s84
      %p96 = scmp.eq.s32.totalorder %s18, 1
      %p97 = por %p95, %p96
      %p99 = scmp.ne.s32.totalorder %s84, %s98
      %p100 = scmp.eq.s32.totalorder %s18, 0
      %p101 = por %p99, %p100
      %s102 = ssub.s32 %s19, %s31
      %s103 = ssub.s32 %s20, %s27
      %s104 = sor.u32 %s102, %s103
      %p105 = scmp.eq.s32.totalorder %s104, 0
      %s107 = sadd.s32 %s106, 1
      %s108 = scalar_select %p105, %s106, %s107
      %p111 = pneg %p105
      %p112 = scmp.eq.s32.totalorder %s12, 1
      %p113 = por %p111, %p112
      %p114 = scmp.ne.s32.totalorder %s106, %s109
      %p115 = scmp.eq.s32.totalorder %s12, 0
      %p116 = por %p114, %p115
      %p117 = scmp.ne.s32.totalorder %s106, %s109
      %p118 = scmp.eq.s32.totalorder %s17, 1
      %p119 = por %p117, %p118
      %p120 = scmp.ne.s32.totalorder %s109, %s110
      %p121 = scmp.eq.s32.totalorder %s17, 0
      %p122 = por %p120, %p121
      %p123 = scmp.ne.s32.totalorder %s109, %s110
      %p124 = scmp.eq.s32.totalorder %s18, 1
      %p125 = por %p123, %p124
      %p127 = scmp.ne.s32.totalorder %s110, %s126
      %p128 = scmp.eq.s32.totalorder %s18, 0
      %p129 = por %p127, %p128
      %p130 = scmp.le.s32.totalorder 1, %s12
      %p131 = scmp.lt.s32.totalorder %s12, 3
      %p132 = pnand %p130, %p131
      %p133 = pneg %p132
      // Predicated region
      $region9: #{multi_head_self_attention.5} parent=5 // pred_check
        _
      $region10: #{multi_head_self_attention.5} parent=5 // pred_check_branch
        %135 = sbr.rel (%p132) target = $region12
      $region11: #{multi_head_self_attention.5} parent=5 // pred_region
        %s136 = ssub.s32 %s12, 1
        // Predicated region
        $region13: #{multi_head_self_attention.5} parent=11 // pred_check
          %p137 = pneg %p73
        $region14: #{multi_head_self_attention.5} parent=11 // pred_check_branch
          %139 = sbr.rel (%p137) target = $region16
        $region15: #{multi_head_self_attention.5} parent=11 // pred_region
          _
        $region16: #{multi_head_self_attention.5} parent=11 // pred_fallthru
          _
        // Predicated region
        $region17: #{multi_head_self_attention.5} parent=11 // pred_check
          %p140 = pneg %p94
        $region18: #{multi_head_self_attention.5} parent=11 // pred_check_branch
          %142 = sbr.rel (%p140) target = $region20
        $region19: #{multi_head_self_attention.5} parent=11 // pred_region
          _
        $region20: #{multi_head_self_attention.5} parent=11 // pred_fallthru
          _
      $region12: #{multi_head_self_attention.5} parent=5 // pred_fallthru
        _
      %p143 = scmp.lt.s32.totalorder %s12, 2
      // Predicated region
      $region21: #{multi_head_self_attention.5} parent=5 // pred_check
        %p144 = pneg %p143
      $region22: #{multi_head_self_attention.5} parent=5 // pred_check_branch
        %146 = sbr.rel (%p144) target = $region24
      $region23: #{multi_head_self_attention.5} parent=5 // pred_region
        // Predicated region
        $region25: #{multi_head_self_attention.5} parent=23 // pred_check
          %p147 = pneg %p46
        $region26: #{multi_head_self_attention.5} parent=23 // pred_check_branch
          %149 = sbr.rel (%p147) target = $region28
        $region27: #{multi_head_self_attention.5} parent=23 // pred_region
          %p150 = scmp.lt.s32.totalorder %s19, 1
          %s151 = scalar_select %p150, %s19, 1
          %p152 = scmp.lt.s32.totalorder %s20, 0
          %s153 = scalar_select %p152, %s20, 0
          %s154 = sadd.s32 %s153, %s151
          %s155 = smul.addr %s154, 4
          %s156 = scalar_lea.vmem %s0, %s155
        $region28: #{multi_head_self_attention.5} parent=23 // pred_fallthru
          _
      $region24: #{multi_head_self_attention.5} parent=5 // pred_fallthru
        _
      %p157 = scmp.le.s32.totalorder 1, %s12
      %p158 = scmp.lt.s32.totalorder %s12, 3
      %p159 = pnand %p157, %p158
      %p160 = pneg %p159
      // Predicated region
      $region29: #{multi_head_self_attention.5} parent=5 // pred_check
        _
      $region30: #{multi_head_self_attention.5} parent=5 // pred_check_branch
        %162 = sbr.rel (%p159) target = $region32
      $region31: #{multi_head_self_attention.5} parent=5 // pred_region
        %s163 = ssub.s32 %s12, 1
        %p164 = scmp.lt.s32.totalorder %s21, 1
        %s165 = scalar_select %p164, %s21, 1
        %p166 = scmp.lt.s32.totalorder %s22, 0
        %s167 = scalar_select %p166, %s22, 0
        %s168 = sadd.s32 %s167, %s165
        %s169 = smul.addr %s168, 4
        %s170 = scalar_lea.vmem %s0, %s169
        %p171 = pneg %p52
        %p172 = pneg %p49
        %p173 = pneg %p73
        %p174 = pneg %p70
        %p175 = pneg %p94
        %p176 = pneg %p91
        %p177 = pneg %p122
        %p178 = pneg %p119
        %s179 = sand.u32 %s109, 1
        %s180 = scalar_lea.sflag [#allocation3], %s179
        %s181 = sand.u32 %s109, 1
        %s182 = smul.addr %s181, 8
        %s183 = scalar_lea.vmem [#allocation2], %s182
        %p184 = scmp.lt.s32.totalorder %s21, 1
        %s185 = scalar_select %p184, %s21, 1
        %p186 = scmp.lt.s32.totalorder %s22, 0
        %s187 = scalar_select %p186, %s22, 0
        %s188 = sadd.s32 %s187, %s185
        %s189 = smul.addr %s188, 4
        %s190 = scalar_lea.vmem %s0, %s189
        %v192 = vld [vmem:[%s190] sm:$0xf]
        %v193 = vld [vmem:[%s1] sm:$0xf]
        %v194 = vld [vmem:[%s1 + $0x4] sm:$0xf]
        %v195 = vld [vmem:[%s1 + $0x8] sm:$0xf]
        %v196 = vld [vmem:[%s1 + $0xc] sm:$0xf]
        %v197 = vld [vmem:[%s2] sm:$0x1]
        %v199 = vperm.slane %v197, 0
        %v205 = vunpack.c.l.b16 %v193
        %v206 = vunpack.c.l.b16 %v194
        %v207 = vunpack.c.l.b16 %v195
        %v208 = vunpack.c.l.b16 %v196
        %v209 = vpack.c.b16 %v206, %v205
        %v210 = vpack.c.b16 %v208, %v207
        %vm213 = vcmask 261120
        %v215 = vsel %vm213, %v192, 0
        %217 = vmatpush.bf16.msra.mxu0 0
        %218 = vmatpush.bf16.msra.mxu0 0
        %219 = vmatpush.bf16.msra.mxu0 0
        %220 = vmatpush.bf16.msra.mxu0 0
        %221 = vmatpush.bf16.msra.mxu0 0
        %222 = vmatpush.bf16.msra.mxu0 0
        %223 = vmatpush.bf16.msra.mxu0 %v210
        %224 = vmatpush.bf16.msra.mxu0 %v209
        %225 = vmatmul.bf16.gmra.mxu0 %v215
        %v226 = vpop.f32.mrf.mxu0
        %v227 = vadd.f32 %v199, %v226
        %v228 = vpop.f32.mrf.mxu0
        %229 = vdwg.mxu0
        %230 = vst.msk [vmem:[%s183] sm:$0xff] %vm213, %v227
        %s231 = sand.u32 %s109, 1
        %s232 = scalar_lea.sflag [#allocation3], %s231
        %s233 = sand.u32 %s109, 1
        %s234 = smul.addr %s233, 8
        %s235 = scalar_lea.vmem [#allocation2], %s234
        // Predicated region
        $region33: #{multi_head_self_attention.5} parent=31 // pred_check
          %p236 = pneg %p119
        $region34: #{multi_head_self_attention.5} parent=31 // pred_check_branch
          %238 = sbr.rel (%p236) target = $region36
        $region35: #{multi_head_self_attention.5} parent=31 // pred_region
          %240 = vsyncadd %s232, 0
          %s241 = sadd.s32 %s22, %s21
          %s242 = smul.addr %s241, 8
          %s243 = scalar_lea.hbm %s3, %s242
          %s245 = sshll.u32 %s235, 4
          %s246 = int_to_ptr.vmem [resolvable:$true] %s245
          %s247 = sshll.u32 %s243, 4
          %s248 = int_to_ptr.hbm [resolvable:$true] %s247
          %250 = dma.vmem_to_hbm [thread:$0]  %s246, 128, %s248, %s232
        $region36: #{multi_head_self_attention.5} parent=31 // pred_fallthru
          _
      $region32: #{multi_head_self_attention.5} parent=5 // pred_fallthru
        _
      %p251 = scmp.le.s32.totalorder 2, %s12
      // Predicated region
      $region37: #{multi_head_self_attention.5} parent=5 // pred_check
        %p252 = pneg %p251
      $region38: #{multi_head_self_attention.5} parent=5 // pred_check_branch
        %254 = sbr.rel (%p252) target = $region40
      $region39: #{multi_head_self_attention.5} parent=5 // pred_region
        %s255 = ssub.s32 %s12, 2
        // Predicated region
        $region41: #{multi_head_self_attention.5} parent=39 // pred_check
          %p256 = pneg %p125
        $region42: #{multi_head_self_attention.5} parent=39 // pred_check_branch
          %258 = sbr.rel (%p256) target = $region44
        $region43: #{multi_head_self_attention.5} parent=39 // pred_region
          %s259 = sand.u32 %s110, 1
          %s260 = scalar_lea.sflag [#allocation3], %s259
          %s261 = sand.u32 %s110, 1
          %s262 = smul.addr %s261, 8
          %s263 = scalar_lea.vmem [#allocation2], %s262
          %265 = dma.done %s260, 128
        $region44: #{multi_head_self_attention.5} parent=39 // pred_fallthru
          _
      $region40: #{multi_head_self_attention.5} parent=5 // pred_fallthru
        _
    $region6: #{multi_head_self_attention.5} parent=1 // loop_footer
      %s16 = sadd.s32 1, %s12
    $region7: #{multi_head_self_attention.5} parent=1 // loop_footer_branch
      %11 = sbr.rel target = $region3
    $region8: #{multi_head_self_attention.5} parent=1 // loop_exit
      _
    %266 = vsyncpa [#allocation3], 1
    %s267 = scalar_lea.sflag [#allocation3], 1
    %268 = vsyncpa %s267, 1

// kernel: multi_head_self_attention.4
$region0: #{multi_head_self_attention.4}
  #allocation0 [shape = 'u32[]', space=smem, size = 0x4, offset = 0x4, fixed_abs, tag = 'smem constant byte address 0x4 - core index']
  #allocation1 [shape = 'u32[72,128]{1,0:T(1,128)}', space=vmem, size = 0x9000, scoped, tag = 'internal scratch']
  #allocation2 [shape = 'f32[8,4]{1,0:T(8,128)}', space=vmem, size = 0x1000, scoped, tag = 'scratch operand']
  #allocation3 [shape = 'f32[8,4]{1,0:T(8,128)}', space=vmem, size = 0x1000, scoped, tag = 'scratch operand']
  #allocation4 [shape = 'f32[8,32]{1,0:T(8,128)}', space=vmem, size = 0x1000, scoped, tag = 'scratch operand']
  %s0 = inlined_call_operand.vmem [shape: bf16[2,8,32], index: 0, kind: input, shape index: {}]
  %s1 = inlined_call_operand.vmem [shape: bf16[2,8,32], index: 1, kind: input, shape index: {}]
  %s2 = inlined_call_operand.vmem [shape: bf16[2,8,32], index: 2, kind: input, shape index: {}]
  %s3 = inlined_call_operand.vmem [shape: bf16[2,8,32], index: 3, kind: output, shape index: {}]
  %s4 = sld [smem:[#allocation0]]
  $region53: #{multi_head_self_attention.4} parent=0
    _
  %s6 = ssub.s32 1, %s4
  %s7 = scalar_select 0, %s6, %s4
  loop: start=0, step=1, limit=4
  $region2: #{multi_head_self_attention.4} parent=0 // loop_pre_header
    _
  $region3: #{multi_head_self_attention.4} parent=0 // loop_header
    %s9 = sphi 0, %s13
    %p10 = scmp.ge.s32.totalorder %s9, 4
    %s16 = sphi 0, %s42
    %s17 = sphi 0, %s38
    %s18 = sphi 0, %s34
    %s19 = sphi 0, %s30
    %s20 = sphi 0, %s16
    %s21 = sphi 0, %s17
    %s22 = sphi 0, %s18
    %s23 = sphi 0, %s19
    %s24 = sphi 0, %s20
    %s25 = sphi 0, %s21
    %s26 = sphi 0, %s22
    %s27 = sphi 0, %s23
    %s49 = sphi 0, %s51
    %s52 = sphi 0, %s49
    %s53 = sphi 0, %s52
    %s69 = sphi 0, %s53
    %s79 = sphi 0, %s81
    %s82 = sphi 0, %s79
    %s83 = sphi 0, %s82
    %s99 = sphi 0, %s83
    %s109 = sphi 0, %s111
    %s112 = sphi 0, %s109
    %s113 = sphi 0, %s112
    %s129 = sphi 0, %s113
    %s139 = sphi 0, %s141
    %s142 = sphi 0, %s139
    %s143 = sphi 0, %s142
    %s159 = sphi 0, %s143
  $region4: #{multi_head_self_attention.4} parent=0 // loop_header_branch
    %12 = sbr.rel (%p10) target = $region8
  $region5: #{multi_head_self_attention.4} parent=0 // loop_body
    %s14 = ssub.s32 %s9, 1
    %s15 = ssub.s32 %s9, 2
    %s28 = sadd.s32 1, %s19
    %p29 = scmp.ge.s32.totalorder %s28, 1
    %s30 = scalar_select %p29, 0, %s28
    %s31 = sadd.s32 1, %s18
    %s32 = scalar_select %p29, %s31, %s18
    %p33 = scmp.ge.s32.totalorder %s32, 1
    %s34 = scalar_select %p33, 0, %s32
    %s35 = sadd.s32 1, %s17
    %s36 = scalar_select %p33, %s35, %s17
    %p37 = scmp.ge.s32.totalorder %s36, 1
    %s38 = scalar_select %p37, 0, %s36
    %s39 = sadd.s32 1, %s16
    %s40 = scalar_select %p37, %s39, %s16
    %p41 = scmp.ge.s32.totalorder %s40, 2
    %s42 = scalar_select %p41, 0, %s40
    %s43 = ssub.s32 %s16, %s42
    %s44 = ssub.s32 %s18, %s34
    %s45 = sor.u32 %s43, %s44
    %s46 = ssub.s32 %s17, %s38
    %s47 = sor.u32 %s45, %s46
    %p48 = scmp.eq.s32.totalorder %s47, 0
    %s50 = sadd.s32 %s49, 1
    %s51 = scalar_select %p48, %s49, %s50
    %p54 = pneg %p48
    %p55 = scmp.eq.s32.totalorder %s9, 1
    %p56 = por %p54, %p55
    %p57 = scmp.ne.s32.totalorder %s49, %s52
    %p58 = scmp.eq.s32.totalorder %s9, 0
    %p59 = por %p57, %p58
    %p60 = scmp.ne.s32.totalorder %s49, %s52
    %p61 = scmp.eq.s32.totalorder %s14, 1
    %p62 = por %p60, %p61
    %p63 = scmp.ne.s32.totalorder %s52, %s53
    %p64 = scmp.eq.s32.totalorder %s14, 0
    %p65 = por %p63, %p64
    %p66 = scmp.ne.s32.totalorder %s52, %s53
    %p67 = scmp.eq.s32.totalorder %s15, 1
    %p68 = por %p66, %p67
    %p70 = scmp.ne.s32.totalorder %s53, %s69
    %p71 = scmp.eq.s32.totalorder %s15, 0
    %p72 = por %p70, %p71
    %s73 = ssub.s32 %s16, %s42
    %s74 = ssub.s32 %s19, %s30
    %s75 = sor.u32 %s73, %s74
    %s76 = ssub.s32 %s17, %s38
    %s77 = sor.u32 %s75, %s76
    %p78 = scmp.eq.s32.totalorder %s77, 0
    %s80 = sadd.s32 %s79, 1
    %s81 = scalar_select %p78, %s79, %s80
    %p84 = pneg %p78
    %p85 = scmp.eq.s32.totalorder %s9, 1
    %p86 = por %p84, %p85
    %p87 = scmp.ne.s32.totalorder %s79, %s82
    %p88 = scmp.eq.s32.totalorder %s9, 0
    %p89 = por %p87, %p88
    %p90 = scmp.ne.s32.totalorder %s79, %s82
    %p91 = scmp.eq.s32.totalorder %s14, 1
    %p92 = por %p90, %p91
    %p93 = scmp.ne.s32.totalorder %s82, %s83
    %p94 = scmp.eq.s32.totalorder %s14, 0
    %p95 = por %p93, %p94
    %p96 = scmp.ne.s32.totalorder %s82, %s83
    %p97 = scmp.eq.s32.totalorder %s15, 1
    %p98 = por %p96, %p97
    %p100 = scmp.ne.s32.totalorder %s83, %s99
    %p101 = scmp.eq.s32.totalorder %s15, 0
    %p102 = por %p100, %p101
    %s103 = ssub.s32 %s16, %s42
    %s104 = ssub.s32 %s19, %s30
    %s105 = sor.u32 %s103, %s104
    %s106 = ssub.s32 %s17, %s38
    %s107 = sor.u32 %s105, %s106
    %p108 = scmp.eq.s32.totalorder %s107, 0
    %s110 = sadd.s32 %s109, 1
    %s111 = scalar_select %p108, %s109, %s110
    %p114 = pneg %p108
    %p115 = scmp.eq.s32.totalorder %s9, 1
    %p116 = por %p114, %p115
    %p117 = scmp.ne.s32.totalorder %s109, %s112
    %p118 = scmp.eq.s32.totalorder %s9, 0
    %p119 = por %p117, %p118
    %p120 = scmp.ne.s32.totalorder %s109, %s112
    %p121 = scmp.eq.s32.totalorder %s14, 1
    %p122 = por %p120, %p121
    %p123 = scmp.ne.s32.totalorder %s112, %s113
    %p124 = scmp.eq.s32.totalorder %s14, 0
    %p125 = por %p123, %p124
    %p126 = scmp.ne.s32.totalorder %s112, %s113
    %p127 = scmp.eq.s32.totalorder %s15, 1
    %p128 = por %p126, %p127
    %p130 = scmp.ne.s32.totalorder %s113, %s129
    %p131 = scmp.eq.s32.totalorder %s15, 0
    %p132 = por %p130, %p131
    %s133 = ssub.s32 %s16, %s42
    %s134 = ssub.s32 %s18, %s34
    %s135 = sor.u32 %s133, %s134
    %s136 = ssub.s32 %s17, %s38
    %s137 = sor.u32 %s135, %s136
    %p138 = scmp.eq.s32.totalorder %s137, 0
    %s140 = sadd.s32 %s139, 1
    %s141 = scalar_select %p138, %s139, %s140
    %p144 = pneg %p138
    %p145 = scmp.eq.s32.totalorder %s9, 1
    %p146 = por %p144, %p145
    %p147 = scmp.ne.s32.totalorder %s139, %s142
    %p148 = scmp.eq.s32.totalorder %s9, 0
    %p149 = por %p147, %p148
    %p150 = scmp.ne.s32.totalorder %s139, %s142
    %p151 = scmp.eq.s32.totalorder %s14, 1
    %p152 = por %p150, %p151
    %p153 = scmp.ne.s32.totalorder %s142, %s143
    %p154 = scmp.eq.s32.totalorder %s14, 0
    %p155 = por %p153, %p154
    %p156 = scmp.ne.s32.totalorder %s142, %s143
    %p157 = scmp.eq.s32.totalorder %s15, 1
    %p158 = por %p156, %p157
    %p160 = scmp.ne.s32.totalorder %s143, %s159
    %p161 = scmp.eq.s32.totalorder %s15, 0
    %p162 = por %p160, %p161
    %p163 = scmp.le.s32.totalorder 1, %s9
    %p164 = scmp.lt.s32.totalorder %s9, 3
    %p165 = pnand %p163, %p164
    %p166 = pneg %p165
    // Predicated region
    $region9: #{multi_head_self_attention.4} parent=5 // pred_check
      _
    $region10: #{multi_head_self_attention.4} parent=5 // pred_check_branch
      %168 = sbr.rel (%p165) target = $region12
    $region11: #{multi_head_self_attention.4} parent=5 // pred_region
      %s169 = ssub.s32 %s9, 1
    $region12: #{multi_head_self_attention.4} parent=5 // pred_fallthru
      _
    %p170 = scmp.lt.s32.totalorder %s9, 2
    // Predicated region
    $region13: #{multi_head_self_attention.4} parent=5 // pred_check
      %p171 = pneg %p170
    $region14: #{multi_head_self_attention.4} parent=5 // pred_check_branch
      %173 = sbr.rel (%p171) target = $region16
    $region15: #{multi_head_self_attention.4} parent=5 // pred_region
      // Predicated region
      $region17: #{multi_head_self_attention.4} parent=15 // pred_check
        %p174 = pneg %p59
      $region18: #{multi_head_self_attention.4} parent=15 // pred_check_branch
        %176 = sbr.rel (%p174) target = $region20
      $region19: #{multi_head_self_attention.4} parent=15 // pred_region
        %p177 = scmp.lt.s32.totalorder %s16, 1
        %s178 = scalar_select %p177, %s16, 1
        %p179 = scmp.lt.s32.totalorder %s18, 0
        %s180 = scalar_select %p179, %s18, 0
        %p181 = scmp.lt.s32.totalorder %s17, 0
        %s182 = scalar_select %p181, %s17, 0
        %s183 = sadd.s32 %s182, %s180
        %s184 = sadd.s32 %s183, %s178
        %s185 = smul.addr %s184, 4
        %s186 = scalar_lea.vmem %s0, %s185
      $region20: #{multi_head_self_attention.4} parent=15 // pred_fallthru
        _
      // Predicated region
      $region21: #{multi_head_self_attention.4} parent=15 // pred_check
        %p187 = pneg %p89
      $region22: #{multi_head_self_attention.4} parent=15 // pred_check_branch
        %189 = sbr.rel (%p187) target = $region24
      $region23: #{multi_head_self_attention.4} parent=15 // pred_region
        %p190 = scmp.lt.s32.totalorder %s16, 1
        %s191 = scalar_select %p190, %s16, 1
        %p192 = scmp.lt.s32.totalorder %s19, 0
        %s193 = scalar_select %p192, %s19, 0
        %p194 = scmp.lt.s32.totalorder %s17, 0
        %s195 = scalar_select %p194, %s17, 0
        %s196 = sadd.s32 %s195, %s193
        %s197 = sadd.s32 %s196, %s191
        %s198 = smul.addr %s197, 4
        %s199 = scalar_lea.vmem %s1, %s198
      $region24: #{multi_head_self_attention.4} parent=15 // pred_fallthru
        _
      // Predicated region
      $region25: #{multi_head_self_attention.4} parent=15 // pred_check
        %p200 = pneg %p119
      $region26: #{multi_head_self_attention.4} parent=15 // pred_check_branch
        %202 = sbr.rel (%p200) target = $region28
      $region27: #{multi_head_self_attention.4} parent=15 // pred_region
        %p203 = scmp.lt.s32.totalorder %s16, 1
        %s204 = scalar_select %p203, %s16, 1
        %p205 = scmp.lt.s32.totalorder %s19, 0
        %s206 = scalar_select %p205, %s19, 0
        %p207 = scmp.lt.s32.totalorder %s17, 0
        %s208 = scalar_select %p207, %s17, 0
        %s209 = sadd.s32 %s208, %s206
        %s210 = sadd.s32 %s209, %s204
        %s211 = smul.addr %s210, 4
        %s212 = scalar_lea.vmem %s2, %s211
      $region28: #{multi_head_self_attention.4} parent=15 // pred_fallthru
        _
    $region16: #{multi_head_self_attention.4} parent=5 // pred_fallthru
      _
    %p213 = scmp.le.s32.totalorder 1, %s9
    %p214 = scmp.lt.s32.totalorder %s9, 3
    %p215 = pnand %p213, %p214
    %p216 = pneg %p215
    // Predicated region
    $region29: #{multi_head_self_attention.4} parent=5 // pred_check
      _
    $region30: #{multi_head_self_attention.4} parent=5 // pred_check_branch
      %218 = sbr.rel (%p215) target = $region32
    $region31: #{multi_head_self_attention.4} parent=5 // pred_region
      %s219 = ssub.s32 %s9, 1
      %p220 = scmp.lt.s32.totalorder %s20, 1
      %s221 = scalar_select %p220, %s20, 1
      %p222 = scmp.lt.s32.totalorder %s22, 0
      %s223 = scalar_select %p222, %s22, 0
      %p224 = scmp.lt.s32.totalorder %s21, 0
      %s225 = scalar_select %p224, %s21, 0
      %s226 = sadd.s32 %s225, %s223
      %s227 = sadd.s32 %s226, %s221
      %s228 = smul.addr %s227, 4
      %s229 = scalar_lea.vmem %s0, %s228
      %p230 = pneg %p65
      %p231 = pneg %p62
      %p232 = scmp.lt.s32.totalorder %s20, 1
      %s233 = scalar_select %p232, %s20, 1
      %p234 = scmp.lt.s32.totalorder %s23, 0
      %s235 = scalar_select %p234, %s23, 0
      %p236 = scmp.lt.s32.totalorder %s21, 0
      %s237 = scalar_select %p236, %s21, 0
      %s238 = sadd.s32 %s237, %s235
      %s239 = sadd.s32 %s238, %s233
      %s240 = smul.addr %s239, 4
      %s241 = scalar_lea.vmem %s1, %s240
      %p242 = pneg %p95
      %p243 = pneg %p92
      %p244 = scmp.lt.s32.totalorder %s20, 1
      %s245 = scalar_select %p244, %s20, 1
      %p246 = scmp.lt.s32.totalorder %s23, 0
      %s247 = scalar_select %p246, %s23, 0
      %p248 = scmp.lt.s32.totalorder %s21, 0
      %s249 = scalar_select %p248, %s21, 0
      %s250 = sadd.s32 %s249, %s247
      %s251 = sadd.s32 %s250, %s245
      %s252 = smul.addr %s251, 4
      %s253 = scalar_lea.vmem %s2, %s252
      %p254 = pneg %p125
      %p255 = pneg %p122
      %p256 = pneg %p155
      %p257 = pneg %p152
      %p258 = scmp.lt.s32.totalorder %s20, 1
      %s259 = scalar_select %p258, %s20, 1
      %p260 = scmp.lt.s32.totalorder %s22, 0
      %s261 = scalar_select %p260, %s22, 0
      %p262 = scmp.lt.s32.totalorder %s21, 0
      %s263 = scalar_select %p262, %s21, 0
      %s264 = sadd.s32 %s263, %s261
      %s265 = sadd.s32 %s264, %s259
      %s266 = smul.addr %s265, 4
      %s267 = scalar_lea.vmem %s3, %s266
      %p268 = scmp.lt.s32.totalorder %s20, 1
      %s269 = scalar_select %p268, %s20, 1
      %p270 = scmp.lt.s32.totalorder %s22, 0
      %s271 = scalar_select %p270, %s22, 0
      %p272 = scmp.lt.s32.totalorder %s21, 0
      %s273 = scalar_select %p272, %s21, 0
      %s274 = sadd.s32 %s273, %s271
      %s275 = sadd.s32 %s274, %s269
      %s276 = smul.addr %s275, 4
      %s277 = scalar_lea.vmem %s0, %s276
      %p278 = scmp.lt.s32.totalorder %s20, 1
      %s279 = scalar_select %p278, %s20, 1
      %p280 = scmp.lt.s32.totalorder %s23, 0
      %s281 = scalar_select %p280, %s23, 0
      %p282 = scmp.lt.s32.totalorder %s21, 0
      %s283 = scalar_select %p282, %s21, 0
      %s284 = sadd.s32 %s283, %s281
      %s285 = sadd.s32 %s284, %s279
      %s286 = smul.addr %s285, 4
      %s287 = scalar_lea.vmem %s1, %s286
      %p288 = scmp.lt.s32.totalorder %s20, 1
      %s289 = scalar_select %p288, %s20, 1
      %p290 = scmp.lt.s32.totalorder %s23, 0
      %s291 = scalar_select %p290, %s23, 0
      %p292 = scmp.lt.s32.totalorder %s21, 0
      %s293 = scalar_select %p292, %s21, 0
      %s294 = sadd.s32 %s293, %s291
      %s295 = sadd.s32 %s294, %s289
      %s296 = smul.addr %s295, 4
      %s297 = scalar_lea.vmem %s2, %s296
      %p298 = scmp.lt.s32.totalorder %s20, 1
      %s299 = scalar_select %p298, %s20, 1
      %p300 = scmp.lt.s32.totalorder %s22, 0
      %s301 = scalar_select %p300, %s22, 0
      %p302 = scmp.lt.s32.totalorder %s21, 0
      %s303 = scalar_select %p302, %s21, 0
      %s304 = sadd.s32 %s303, %s301
      %s305 = sadd.s32 %s304, %s299
      %s306 = smul.addr %s305, 4
      %s307 = scalar_lea.vmem %s3, %s306
      %p309 = scmp.eq.s32.totalorder %s23, 0
      // Predicated region
      $region33: #{multi_head_self_attention.4} parent=31 // pred_check
        %p310 = pneg %p309
      $region34: #{multi_head_self_attention.4} parent=31 // pred_check_branch
        %312 = sbr.rel (%p310) target = $region36
      $region35: #{multi_head_self_attention.4} parent=31 // pred_region
        %vm313 = vcmask 31744
        %314 = vst.msk [vmem:[#allocation2] sm:$0xff] %vm313, -inf
        %315 = vst.msk [vmem:[#allocation3] sm:$0xff] %vm313, 0.0
        %vm316 = vcmask 261120
        %317 = vst.msk [vmem:[#allocation4] sm:$0xff] %vm316, 0.0
      $region36: #{multi_head_self_attention.4} parent=31 // pred_fallthru
        _
      %v318 = vld [vmem:[%s277] sm:$0xf]
      %v319 = vld [vmem:[%s287] sm:$0xf]
      %v320 = vld [vmem:[%s297] sm:$0xf]
      %v321 = vld [vmem:[#allocation2] sm:$0xff]
      %v322 = vld [vmem:[#allocation3] sm:$0xff]
      %v323 = vld [vmem:[#allocation4] sm:$0xff]
      %vm324 = vcmask 64512
      %v326 = vsel %vm324, %v318, 0
      %v329 = vsel %vm324, %v319, 0
      %331 = vmatpush.bf16.xpose.msra.mxu0 0
      %332 = vmatpush.bf16.xpose.msra.mxu0 0
      %333 = vmatpush.bf16.xpose.msra.mxu0 0
      %334 = vmatpush.bf16.xpose.msra.mxu0 0
      %335 = vmatpush.bf16.xpose.msra.mxu0 0
      %336 = vmatpush.bf16.xpose.msra.mxu0 0
      %337 = vmatpush.bf16.xpose.msra.mxu0 0
      %338 = vmatpush.bf16.xpose.msra.mxu0 %v329
      %339 = vmatmul.bf16.gmra.mxu0 %v326
      %v340 = vpop.f32.mrf.mxu0
      %v341 = vadd.f32 0.0, %v340
      %v342 = vpop.f32.mrf.mxu0
      %343 = vdwg.mxu0
      %v344 = vsel %vm324, %v341, -inf
      %345 = vmax.xlane.f32.xlu0 %v344
      %v346 = vpop.xlane.xlu0 %345
      %v347 = vmax.f32 %v321, %v346
      %v348 = vsub.f32 %v321, %v347
      %v349 = vmul.f32 %v348, 1.442695
      %v350 = vpow.pop %v349
      %352 = vset.pattern.permute.xlu0 0
      %353 = vperm.xlu0 %352, %v347
      %v354 = vpop.permute.xlu0 %353
      %v356 = vsub.f32 %v341, %v354
      %v357 = vmul.f32 %v356, 1.442695
      %v358 = vpow.pop %v357
      %v359 = vmul.f32 %v350, %v322
      %v360 = vsel %vm324, %v358, 0.0
      %361 = vadd.xlane.f32.xlu0 %v360
      %v362 = vpop.xlane.xlu0 %361
      %v363 = vadd.f32 %v359, %v362
      %365 = vset.pattern.permute.xlu0 0
      %366 = vperm.xlu0 %365, %v350
      %v367 = vpop.permute.xlu0 %366
      %v369 = vmul.f32 %v367, %v323
      %v370 = vpack.c.bf16 %v358, %v358
      %v372 = vsel %vm324, %v370, 0
      %vm374 = vcmask 1043456
      %v376 = vsel %vm374, %v320, 0
      %378 = vmatpush.bf16.msra.mxu0 0
      %379 = vmatpush.bf16.msra.mxu0 0
      %380 = vmatpush.bf16.msra.mxu0 0
      %381 = vmatpush.bf16.msra.mxu0 0
      %382 = vmatpush.bf16.msra.mxu0 0
      %383 = vmatpush.bf16.msra.mxu0 0
      %384 = vmatpush.bf16.msra.mxu0 0
      %385 = vmatpush.bf16.msra.mxu0 %v376
      %386 = vmatmul.bf16.gmra.mxu0 %v372
      %v387 = vpop.f32.mrf.mxu0
      %v388 = vadd.f32 0.0, %v387
      %v389 = vpop.f32.mrf.mxu0
      %390 = vdwg.mxu0
      %v391 = vadd.f32 %v369, %v388
      %v393 = vunpack.c.l.b16 %v318
      %v394 = vpack.c.b16 %v393, %v393
      %395 = vrot.lane.b32.xlu0 %v394, 120
      %v396 = vpop.permute.xlu0 %395
      %v398 = vunpack.c.l.b16 %v319
      %v399 = vpack.c.b16 %v398, %v398
      %400 = vrot.lane.b32.xlu0 %v399, 120
      %v401 = vpop.permute.xlu0 %400
      %v403 = vsel %vm324, %v396, 0
      %v406 = vsel %vm324, %v401, 0
      %408 = vmatpush.bf16.xpose.msra.mxu0 0
      %409 = vmatpush.bf16.xpose.msra.mxu0 0
      %410 = vmatpush.bf16.xpose.msra.mxu0 0
      %411 = vmatpush.bf16.xpose.msra.mxu0 0
      %412 = vmatpush.bf16.xpose.msra.mxu0 0
      %413 = vmatpush.bf16.xpose.msra.mxu0 0
      %414 = vmatpush.bf16.xpose.msra.mxu0 0
      %415 = vmatpush.bf16.xpose.msra.mxu0 %v406
      %416 = vmatmul.bf16.gmra.mxu0 %v403
      %v417 = vpop.f32.mrf.mxu0
      %v418 = vadd.f32 0.0, %v417
      %v419 = vpop.f32.mrf.mxu0
      %420 = vdwg.mxu0
      %v421 = vsel %vm324, %v418, -inf
      %422 = vmax.xlane.f32.xlu0 %v421
      %v423 = vpop.xlane.xlu0 %422
      %v424 = vmax.f32 %v321, %v423
      %v425 = vsub.f32 %v321, %v424
      %v426 = vmul.f32 %v425, 1.442695
      %v427 = vpow.pop %v426
      %429 = vset.pattern.permute.xlu0 1
      %430 = vperm.xlu0 %429, %v424
      %v431 = vpop.permute.xlu0 %430
      %v433 = vsub.f32 %v418, %v431
      %v434 = vmul.f32 %v433, 1.442695
      %v435 = vpow.pop %v434
      %v436 = vmul.f32 %v427, %v322
      %v437 = vsel %vm324, %v435, 0.0
      %438 = vadd.xlane.f32.xlu0 %v437
      %v439 = vpop.xlane.xlu0 %438
      %v440 = vadd.f32 %v436, %v439
      %442 = vset.pattern.permute.xlu0 1
      %443 = vperm.xlu0 %442, %v427
      %v444 = vpop.permute.xlu0 %443
      %v446 = vmul.f32 %v444, %v323
      %v447 = vpack.c.bf16 %v435, %v435
      %v449 = vunpack.c.l.b16 %v320
      %v450 = vpack.c.b16 %v449, %v449
      %451 = vrot.lane.b32.xlu0 %v450, 120
      %v452 = vpop.permute.xlu0 %451
      %v454 = vsel %vm324, %v447, 0
      %v457 = vsel %vm374, %v452, 0
      %459 = vmatpush.bf16.msra.mxu0 0
      %460 = vmatpush.bf16.msra.mxu0 0
      %461 = vmatpush.bf16.msra.mxu0 0
      %462 = vmatpush.bf16.msra.mxu0 0
      %463 = vmatpush.bf16.msra.mxu0 0
      %464 = vmatpush.bf16.msra.mxu0 0
      %465 = vmatpush.bf16.msra.mxu0 0
      %466 = vmatpush.bf16.msra.mxu0 %v457
      %467 = vmatmul.bf16.gmra.mxu0 %v454
      %v468 = vpop.f32.mrf.mxu0
      %v469 = vadd.f32 0.0, %v468
      %v470 = vpop.f32.mrf.mxu0
      %471 = vdwg.mxu0
      %473 = vrot.lane.b32.xlu0 %v469, 8
      %v474 = vpop.permute.xlu0 %473
      %v476 = vadd.f32 %v446, %v474
      %477 = vrot.lane.b32.xlu0 %v394, 112
      %v478 = vpop.permute.xlu0 %477
      %479 = vrot.lane.b32.xlu0 %v399, 112
      %v480 = vpop.permute.xlu0 %479
      %v482 = vsel %vm324, %v478, 0
      %v485 = vsel %vm324, %v480, 0
      %487 = vmatpush.bf16.xpose.msra.mxu0 0
      %488 = vmatpush.bf16.xpose.msra.mxu0 0
      %489 = vmatpush.bf16.xpose.msra.mxu0 0
      %490 = vmatpush.bf16.xpose.msra.mxu0 0
      %491 = vmatpush.bf16.xpose.msra.mxu0 0
      %492 = vmatpush.bf16.xpose.msra.mxu0 0
      %493 = vmatpush.bf16.xpose.msra.mxu0 0
      %494 = vmatpush.bf16.xpose.msra.mxu0 %v485
      %495 = vmatmul.bf16.gmra.mxu0 %v482
      %v496 = vpop.f32.mrf.mxu0
      %v497 = vadd.f32 0.0, %v496
      %v498 = vpop.f32.mrf.mxu0
      %499 = vdwg.mxu0
      %v500 = vsel %vm324, %v497, -inf
      %501 = vmax.xlane.f32.xlu0 %v500
      %v502 = vpop.xlane.xlu0 %501
      %v503 = vmax.f32 %v321, %v502
      %v504 = vsub.f32 %v321, %v503
      %v505 = vmul.f32 %v504, 1.442695
      %v506 = vpow.pop %v505
      %508 = vset.pattern.permute.xlu0 2
      %509 = vperm.xlu0 %508, %v503
      %v510 = vpop.permute.xlu0 %509
      %v512 = vsub.f32 %v497, %v510
      %v513 = vmul.f32 %v512, 1.442695
      %v514 = vpow.pop %v513
      %v515 = vmul.f32 %v506, %v322
      %v516 = vsel %vm324, %v514, 0.0
      %517 = vadd.xlane.f32.xlu0 %v516
      %v518 = vpop.xlane.xlu0 %517
      %v519 = vadd.f32 %v515, %v518
      %521 = vset.pattern.permute.xlu0 2
      %522 = vperm.xlu0 %521, %v506
      %v523 = vpop.permute.xlu0 %522
      %v525 = vmul.f32 %v523, %v323
      %v526 = vpack.c.bf16 %v514, %v514
      %527 = vrot.lane.b32.xlu0 %v450, 112
      %v528 = vpop.permute.xlu0 %527
      %v530 = vsel %vm324, %v526, 0
      %v533 = vsel %vm374, %v528, 0
      %535 = vmatpush.bf16.msra.mxu0 0
      %536 = vmatpush.bf16.msra.mxu0 0
      %537 = vmatpush.bf16.msra.mxu0 0
      %538 = vmatpush.bf16.msra.mxu0 0
      %539 = vmatpush.bf16.msra.mxu0 0
      %540 = vmatpush.bf16.msra.mxu0 0
      %541 = vmatpush.bf16.msra.mxu0 0
      %542 = vmatpush.bf16.msra.mxu0 %v533
      %543 = vmatmul.bf16.gmra.mxu0 %v530
      %v544 = vpop.f32.mrf.mxu0
      %v545 = vadd.f32 0.0, %v544
      %v546 = vpop.f32.mrf.mxu0
      %547 = vdwg.mxu0
      %549 = vrot.lane.b32.xlu0 %v545, 16
      %v550 = vpop.permute.xlu0 %549
      %v552 = vadd.f32 %v525, %v550
      %553 = vrot.lane.b32.xlu0 %v394, 104
      %v554 = vpop.permute.xlu0 %553
      %555 = vrot.lane.b32.xlu0 %v399, 104
      %v556 = vpop.permute.xlu0 %555
      %v558 = vsel %vm324, %v554, 0
      %v561 = vsel %vm324, %v556, 0
      %563 = vmatpush.bf16.xpose.msra.mxu0 0
      %564 = vmatpush.bf16.xpose.msra.mxu0 0
      %565 = vmatpush.bf16.xpose.msra.mxu0 0
      %566 = vmatpush.bf16.xpose.msra.mxu0 0
      %567 = vmatpush.bf16.xpose.msra.mxu0 0
      %568 = vmatpush.bf16.xpose.msra.mxu0 0
      %569 = vmatpush.bf16.xpose.msra.mxu0 0
      %570 = vmatpush.bf16.xpose.msra.mxu0 %v561
      %571 = vmatmul.bf16.gmra.mxu0 %v558
      %v572 = vpop.f32.mrf.mxu0
      %v573 = vadd.f32 0.0, %v572
      %v574 = vpop.f32.mrf.mxu0
      %575 = vdwg.mxu0
      %v576 = vsel %vm324, %v573, -inf
      %577 = vmax.xlane.f32.xlu0 %v576
      %v578 = vpop.xlane.xlu0 %577
      %v579 = vmax.f32 %v321, %v578
      %v580 = vsub.f32 %v321, %v579
      %v581 = vmul.f32 %v580, 1.442695
      %v582 = vpow.pop %v581
      %584 = vset.pattern.permute.xlu0 3
      %585 = vperm.xlu0 %584, %v579
      %v586 = vpop.permute.xlu0 %585
      %v588 = vsub.f32 %v573, %v586
      %v589 = vmul.f32 %v588, 1.442695
      %v590 = vpow.pop %v589
      %v591 = vmul.f32 %v582, %v322
      %v592 = vsel %vm324, %v590, 0.0
      %593 = vadd.xlane.f32.xlu0 %v592
      %v594 = vpop.xlane.xlu0 %593
      %v595 = vadd.f32 %v591, %v594
      %597 = vset.pattern.permute.xlu0 3
      %598 = vperm.xlu0 %597, %v582
      %v599 = vpop.permute.xlu0 %598
      %v601 = vmul.f32 %v599, %v323
      %v602 = vpack.c.bf16 %v590, %v590
      %603 = vrot.lane.b32.xlu0 %v450, 104
      %v604 = vpop.permute.xlu0 %603
      %v606 = vsel %vm324, %v602, 0
      %v609 = vsel %vm374, %v604, 0
      %611 = vmatpush.bf16.msra.mxu0 0
      %612 = vmatpush.bf16.msra.mxu0 0
      %613 = vmatpush.bf16.msra.mxu0 0
      %614 = vmatpush.bf16.msra.mxu0 0
      %615 = vmatpush.bf16.msra.mxu0 0
      %616 = vmatpush.bf16.msra.mxu0 0
      %617 = vmatpush.bf16.msra.mxu0 0
      %618 = vmatpush.bf16.msra.mxu0 %v609
      %619 = vmatmul.bf16.gmra.mxu0 %v606
      %v620 = vpop.f32.mrf.mxu0
      %v621 = vadd.f32 0.0, %v620
      %v622 = vpop.f32.mrf.mxu0
      %623 = vdwg.mxu0
      %625 = vrot.lane.b32.xlu0 %v621, 24
      %v626 = vpop.permute.xlu0 %625
      %v628 = vadd.f32 %v601, %v626
      %vm629 = vcmask 7168
      %v630 = vsel %vm629, %v347, %v424
      %vm631 = vcmask 15360
      %v632 = vsel %vm631, %v630, %v503
      %vm633 = vcmask 23552
      %v634 = vsel %vm633, %v632, %v579
      %vm635 = vcmask 31744
      %636 = vst.msk [vmem:[#allocation2] sm:$0xff] %vm635, %v634
      %v637 = vsel %vm629, %v363, %v440
      %v638 = vsel %vm631, %v637, %v519
      %v639 = vsel %vm633, %v638, %v595
      %640 = vst.msk [vmem:[#allocation3] sm:$0xff] %vm635, %v639
      %v641 = vsel %vm324, %v391, %v476
      %vm642 = vcmask 130048
      %v643 = vsel %vm642, %v641, %v552
      %vm644 = vcmask 195584
      %v645 = vsel %vm644, %v643, %v628
      %vm646 = vcmask 261120
      %647 = vst.msk [vmem:[#allocation4] sm:$0xff] %vm646, %v645
      // Predicated region
      $region37: #{multi_head_self_attention.4} parent=31 // pred_check
        %p648 = pneg %p309
      $region38: #{multi_head_self_attention.4} parent=31 // pred_check_branch
        %650 = sbr.rel (%p648) target = $region40
      $region39: #{multi_head_self_attention.4} parent=31 // pred_region
        %v651 = vld [vmem:[#allocation3] sm:$0xff]
        %v652 = vrcp.pop %v651
        %v653 = vld [vmem:[#allocation4] sm:$0xff]
        %655 = vset.pattern.permute.xlu0 0
        %656 = vperm.xlu0 %655, %v652
        %v657 = vpop.permute.xlu0 %656
        %v659 = vmul.f32 %v653, %v657
        %660 = vset.pattern.permute.xlu0 1
        %661 = vperm.xlu0 %660, %v652
        %v662 = vpop.permute.xlu0 %661
        %v664 = vmul.f32 %v653, %v662
        %665 = vset.pattern.permute.xlu0 2
        %666 = vperm.xlu0 %665, %v652
        %v667 = vpop.permute.xlu0 %666
        %v669 = vmul.f32 %v653, %v667
        %670 = vset.pattern.permute.xlu0 3
        %671 = vperm.xlu0 %670, %v652
        %v672 = vpop.permute.xlu0 %671
        %v674 = vmul.f32 %v653, %v672
        %v675 = vsel %vm324, %v659, %v664
        %v676 = vsel %vm642, %v675, %v669
        %v677 = vsel %vm644, %v676, %v674
        %v678 = vpack.c.bf16 %v677, %v677
        %vm679 = vcmask 257024
        %680 = vst.msk [vmem:[%s307] sm:$0xf] %vm679, %v678
      $region40: #{multi_head_self_attention.4} parent=31 // pred_fallthru
        _
      %p681 = scmp.lt.s32.totalorder %s20, 1
      %s682 = scalar_select %p681, %s20, 1
      %p683 = scmp.lt.s32.totalorder %s22, 0
      %s684 = scalar_select %p683, %s22, 0
      %p685 = scmp.lt.s32.totalorder %s21, 0
      %s686 = scalar_select %p685, %s21, 0
      %s687 = sadd.s32 %s686, %s684
      %s688 = sadd.s32 %s687, %s682
      %s689 = smul.addr %s688, 4
      %s690 = scalar_lea.vmem %s3, %s689
      // Predicated region
      $region41: #{multi_head_self_attention.4} parent=31 // pred_check
        %p691 = pneg %p152
      $region42: #{multi_head_self_attention.4} parent=31 // pred_check_branch
        %693 = sbr.rel (%p691) target = $region44
      $region43: #{multi_head_self_attention.4} parent=31 // pred_region
        _
      $region44: #{multi_head_self_attention.4} parent=31 // pred_fallthru
        _
    $region32: #{multi_head_self_attention.4} parent=5 // pred_fallthru
      _
    %p694 = scmp.le.s32.totalorder 2, %s9
    // Predicated region
    $region45: #{multi_head_self_attention.4} parent=5 // pred_check
      %p695 = pneg %p694
    $region46: #{multi_head_self_attention.4} parent=5 // pred_check_branch
      %697 = sbr.rel (%p695) target = $region48
    $region47: #{multi_head_self_attention.4} parent=5 // pred_region
      %s698 = ssub.s32 %s9, 2
      // Predicated region
      $region49: #{multi_head_self_attention.4} parent=47 // pred_check
        %p699 = pneg %p158
      $region50: #{multi_head_self_attention.4} parent=47 // pred_check_branch
        %701 = sbr.rel (%p699) target = $region52
      $region51: #{multi_head_self_attention.4} parent=47 // pred_region
        %p702 = scmp.lt.s32.totalorder %s24, 1
        %s703 = scalar_select %p702, %s24, 1
        %p704 = scmp.lt.s32.totalorder %s26, 0
        %s705 = scalar_select %p704, %s26, 0
        %p706 = scmp.lt.s32.totalorder %s25, 0
        %s707 = scalar_select %p706, %s25, 0
        %s708 = sadd.s32 %s707, %s705
        %s709 = sadd.s32 %s708, %s703
        %s710 = smul.addr %s709, 4
        %s711 = scalar_lea.vmem %s3, %s710
      $region52: #{multi_head_self_attention.4} parent=47 // pred_fallthru
        _
    $region48: #{multi_head_self_attention.4} parent=5 // pred_fallthru
      _
  $region6: #{multi_head_self_attention.4} parent=0 // loop_footer
    %s13 = sadd.s32 1, %s9
  $region7: #{multi_head_self_attention.4} parent=0 // loop_footer_branch
    %8 = sbr.rel target = $region3
  $region8: #{multi_head_self_attention.4} parent=0 // loop_exit
    _

</llo_original>
